<compile_context>
chip_gen: v7x
topology: tpu7x:2x2x1
jax: 0.10.0
libtpu: 0.0.40
codegen_flags: <defaults>
</compile_context>

<pallas_src>
import functools

import jax
import jax.numpy as jnp
from jax.experimental import pallas as pl
from jax.experimental.pallas import tpu as pltpu


# ---------------------------------------------------------------------------
# 2-D ortho (I)DFT via stacked real block-matmuls (no native FFT in Pallas).
# ---------------------------------------------------------------------------
def _dft2(xr, xi, fhs, fws, inverse):
    """2-D ortho DFT (inverse=False) / IDFT (inverse=True) of xr + i*xi.

    fhs = [hr; hi]  (2H, H)  bf16 — row-stacked DFT matrix for the H axis
    fws = [wr | wi] (W, 2W)  bf16 — col-stacked DFT matrix for the W axis

    Each complex matrix product is ONE stacked real matmul (all four real
    products in a single MXU call), followed by cheap VPU add/sub combines.
    Operands are cast to bf16 once; accumulation is f32.
    """
    H, W = xr.shape

    # Left multiply:  P = [hr; hi] @ [xr | xi]   -> (2H, 2W)
    xcat = jnp.concatenate([xr, xi], axis=1).astype(jnp.bfloat16)      # (H, 2W)
    p = jnp.dot(fhs, xcat, preferred_element_type=jnp.float32)         # (2H, 2W)
    p00, p01 = p[:H, :W], p[:H, W:]
    p10, p11 = p[H:, :W], p[H:, W:]
    if inverse:                      # conj(FH) = hr - i*hi
        tr, ti = p00 + p11, p01 - p10
    else:                            # FH = hr + i*hi
        tr, ti = p00 - p11, p01 + p10

    # Right multiply: Q = [tr; ti] @ [wr | wi]   -> (2H, 2W)
    tcat = jnp.concatenate([tr, ti], axis=0).astype(jnp.bfloat16)      # (2H, W)
    q = jnp.dot(tcat, fws, preferred_element_type=jnp.float32)         # (2H, 2W)
    q00, q01 = q[:H, :W], q[:H, W:]
    q10, q11 = q[H:, :W], q[H:, W:]
    if inverse:                      # right-multiply by conj(FW) = wr - i*wi
        return q00 + q11, q10 - q01
    return q00 - q11, q01 + q10


# ---------------------------------------------------------------------------
# Kernel: grid = (B, C).  Coil axis streamed ("arbitrary"), batch "parallel".
# ---------------------------------------------------------------------------
def _data_gd_kernel(x_ref, y_ref, s_ref, mask_ref, fhs_ref, fws_ref, lam_ref,
                    out_ref):
    c = pl.program_id(1)
    num_coils = pl.num_programs(1)

    # Gradient accumulates directly in the resident output block (its block
    # index is constant along the coil axis) -> no separate VMEM scratch.
    @pl.when(c == 0)
    def _():
        out_ref[...] = jnp.zeros_like(out_ref)

    mask = mask_ref[0]                    # (H, W)  f32
    fhs = fhs_ref[...]                    # (2H, H) bf16
    fws = fws_ref[...]                    # (W, 2W) bf16

    xr = x_ref[0, 0]                      # (M, H, W) f32
    xi = x_ref[0, 1]
    sr = s_ref[0, 0, 0]                   # (M, H, W) bf16 (this coil); promoted
    si = s_ref[0, 0, 1]                   #   to f32 inside the VPU combines
    yr = y_ref[0, 0, 0]                   # (H, W) f32 (this coil, contiguous)
    yi = y_ref[0, 0, 1]

    # forwardSoftSenseOpNoShift: coil-combine first (FFT linearity) -> one
    # 2-D DFT per coil instead of M.
    cr = jnp.sum(xr * sr - xi * si, axis=0)                 # (H, W) f32
    ci = jnp.sum(xr * si + xi * sr, axis=0)
    kr, ki = _dft2(cr, ci, fhs, fws, inverse=False)

    # Residual A x - y in k-space.  The two mask multiplies are kept separate
    # so semantics stay exact for non-binary masks.
    rr = kr * mask - yr
    ri = ki * mask - yi

    # adjointSoftSenseOpNoShift: IFFT2_ortho(mask * residual), conj(smaps).
    ir_, ii_ = _dft2(rr * mask, ri * mask, fhs, fws, inverse=True)
    out_ref[0, 0] = out_ref[0, 0] + (ir_[None, :, :] * sr + ii_[None, :, :] * si)
    out_ref[0, 1] = out_ref[0, 1] + (ii_[None, :, :] * sr - ir_[None, :, :] * si)

    # Gradient-descent step on the data term once all coils are accumulated.
    @pl.when(c == num_coils - 1)
    def _():
        lam = lam_ref[0, 0]
        out_ref[0, 0] = xr - lam * out_ref[0, 0]
        out_ref[0, 1] = xi - lam * out_ref[0, 1]


# ---------------------------------------------------------------------------
# Wrapper plumbing.
# ---------------------------------------------------------------------------
def _dft_mats(H, W):
    """Ortho DFT matrices in the stacked real layouts used by _dft2 (bf16)."""
    def _mat(n):
        k = jnp.arange(n, dtype=jnp.float32)
        ang = -2.0 * jnp.pi * jnp.outer(k, k) / n
        s = 1.0 / jnp.sqrt(jnp.float32(n))
        return jnp.cos(ang) * s, jnp.sin(ang) * s
    hr, hi = _mat(H)
    wr, wi = _mat(W)
    fhs = jnp.concatenate([hr, hi], axis=0).astype(jnp.bfloat16)   # (2H, H)
    fws = jnp.concatenate([wr, wi], axis=1).astype(jnp.bfloat16)   # (W, 2W)
    return fhs, fws


def _vmem_limit_bytes(M, H, W, single_buffer):
    """VMEM request from the actual buffer plan, capped below physical."""
    img_blk = 2 * M * H * W * 4                    # x block / out block (f32)
    smaps_blk = 2 * M * H * W * 2                  # per-coil smaps block (bf16)
    y_blk = 2 * H * W * 4                          # per-coil y block (f32)
    mats = (2 * H * H + 2 * W * W) * 2             # fhs + fws (bf16)
    inv_bufs = 1 if single_buffer else 2
    resident = inv_bufs * (2 * img_blk + H * W * 4 + mats)
    streamed = 2 * (smaps_blk + y_blk)             # double-buffered coil stream
    temps = (16 * H * W + 4 * M * H * W) * 4       # DFT intermediates, combines
    est = resident + streamed + temps
    try:
        phys = getattr(pltpu.get_tpu_info(), "vmem_capacity_bytes", None)
    except Exception:
        phys = None
    cap = int(phys * 3 // 4) if phys else 48 * 2 ** 20   # headroom (v7x: 64 MiB)
    return int(min(cap, max(32 * 2 ** 20, 2 * est)))


def _build_call(B, C, M, H, W, single_buffer):
    # Coil-invariant blocks get a single VMEM buffer: their block index never
    # changes along the trailing c axis, so a second buffer is dead weight.
    inv = dict(pipeline_mode=pl.Buffered(1)) if single_buffer else {}
    in_specs = [
        pl.BlockSpec((1, 2, M, H, W), lambda b, c: (b, 0, 0, 0, 0), **inv),   # x (resident)
        pl.BlockSpec((1, 1, 2, H, W), lambda b, c: (b, c, 0, 0, 0)),          # y (streamed)
        pl.BlockSpec((1, 1, 2, M, H, W), lambda b, c: (b, c, 0, 0, 0, 0)),    # smaps (streamed, bf16)
        pl.BlockSpec((1, H, W), lambda b, c: (b, 0, 0), **inv),               # mask
        pl.BlockSpec((2 * H, H), lambda b, c: (0, 0), **inv),                 # DFT_H stacked
        pl.BlockSpec((W, 2 * W), lambda b, c: (0, 0), **inv),                 # DFT_W stacked
        pl.BlockSpec(memory_space=pltpu.MemorySpace.SMEM),                    # data_weight
    ]
    out_specs = pl.BlockSpec((1, 2, M, H, W), lambda b, c: (b, 0, 0, 0, 0), **inv)
    out_shape = jax.ShapeDtypeStruct((B, 2, M, H, W), jnp.float32)
    return pl.pallas_call(
        _data_gd_kernel,
        grid=(B, C),
        in_specs=in_specs,
        out_specs=out_specs,
        out_shape=out_shape,
        compiler_params=pltpu.CompilerParams(
            dimension_semantics=("parallel", "arbitrary"),
            vmem_limit_bytes=_vmem_limit_bytes(M, H, W, single_buffer)),
    )


@functools.partial(jax.jit, static_argnames=("single_buffer",))
def _run(x2, y2, s2, mask, fhs, fws, lam, *, single_buffer):
    B, _, M, H, W = x2.shape
    C = y2.shape[1]
    return _build_call(B, C, M, H, W, single_buffer)(x2, y2, s2, mask, fhs, fws, lam)


# ---------------------------------------------------------------------------
# Public API.
# ---------------------------------------------------------------------------
def prepare_inputs(x, y, smaps, mask):
    """One-time layout / dtype conversion (hoisted out of the per-layer call).

    In a stacked sigmanet cascade, call this ONCE per inference and chain
    data_gd_layer_internal between layers: this avoids re-transposing the
    largest tensor (smaps) every layer and streams it as bf16 (half the HBM
    traffic of f32).
    """
    x2 = jnp.moveaxis(x, -1, 1).astype(jnp.float32)         # [B, 2, M, H, W]
    y2 = jnp.moveaxis(y, -1, 2).astype(jnp.float32)         # [B, C, 2, H, W]  (coil block contiguous)
    s2 = jnp.moveaxis(smaps, -1, 2).astype(jnp.bfloat16)    # [B, C, 2, M, H, W] bf16
    m = mask.astype(jnp.float32)
    fhs, fws = _dft_mats(x.shape[-3], x.shape[-2])
    return x2, y2, s2, m, fhs, fws


_SINGLE_BUFFER_OK = True   # flips to False if this JAX build rejects pl.Buffered(1)


def data_gd_layer_internal(x2, y2, s2, mask, fhs, fws, data_weight):
    """DataGDLayer.forward on the internal [B, 2, M, H, W] layout (chainable)."""
    global _SINGLE_BUFFER_OK
    lam = jnp.reshape(jnp.asarray(data_weight, jnp.float32), (1, 1))
    if _SINGLE_BUFFER_OK:
        try:
            return _run(x2, y2, s2, mask, fhs, fws, lam, single_buffer=True)
        except Exception:
            _SINGLE_BUFFER_OK = False    # fall back to default double buffering
    return _run(x2, y2, s2, mask, fhs, fws, lam, single_buffer=False)


def data_gd_layer(x, y, smaps, mask, data_weight):
    """Drop-in DataGDLayer.forward on the PyTorch layout ([..., 2] complex)."""
    x2, y2, s2, m, fhs, fws = prepare_inputs(x, y, smaps, mask)
    out2 = data_gd_layer_internal(x2, y2, s2, m, fhs, fws, data_weight)
    return jnp.moveaxis(out2, 1, -1)                        # [B, M, H, W, 2]


def data_gd_layer_ref(x, y, smaps, mask, data_weight):
    """Pure-JAX reference of DataGDLayer.forward (complex FFT based)."""
    xc = x[..., 0] + 1j * x[..., 1]                 # [B, M, H, W]
    yc = y[..., 0] + 1j * y[..., 1]                 # [B, C, H, W]
    sc = smaps[..., 0] + 1j * smaps[..., 1]         # [B, C, M, H, W]
    k = jnp.fft.fft2(xc[:, None] * sc, axes=(-2, -1), norm='ortho')
    k = k.sum(axis=2) * mask[:, None]               # forwardSoftSenseOpNoShift
    a = k - yc
    img = jnp.fft.ifft2(a * mask[:, None], axes=(-2, -1), norm='ortho')
    grad = (img[:, :, None] * jnp.conj(sc)).sum(axis=1)   # adjointSoftSenseOpNoShift
    out = xc - data_weight * grad
    return jnp.stack([out.real, out.imag], axis=-1)


if __name__ == "__main__":
    B, C, M, H, W = 2, 4, 2, 16, 16
    lambda_init = 0.5          # DataGDLayer(lambda_init) -> data_weight parameter

    key = jax.random.PRNGKey(0)
    kx, ky, ks, km = jax.random.split(key, 4)
    x = jax.random.normal(kx, (B, M, H, W, 2), dtype=jnp.float32)
    y = jax.random.normal(ky, (B, C, H, W, 2), dtype=jnp.float32)
    smaps = jax.random.normal(ks, (B, C, M, H, W, 2), dtype=jnp.float32)
    mask = (jax.random.uniform(km, (B, H, W)) > 0.4).astype(jnp.float32)

    out = jax.block_until_ready(data_gd_layer(x, y, smaps, mask, lambda_init))
    ref = jax.block_until_ready(data_gd_layer_ref(x, y, smaps, mask, lambda_init))

    assert out.shape == (B, M, H, W, 2)
    # bf16 MXU operands + bf16-streamed smaps (f32 accumulation everywhere);
    # the stacked block matmuls removed the Karatsuba pre-sum cancellation, so
    # the remaining error is bf16-operand bound.  Structural bugs would be O(1).
    err = float(jnp.max(jnp.abs(out - ref)))
    rel = err / float(jnp.max(jnp.abs(ref)))
    assert rel < 2.5e-2, f"error too large: abs={err:.3e} rel={rel:.3e}"

    print("KERNEL_OK")
</pallas_src>

<mosaic_0001>
module attributes {stable_mosaic.version = 11 : i64} {
  func.func @_data_gd_kernel(%arg0: i32, %arg1: i32, %arg2: memref<1x2x2x16x16xf32, #tpu.memory_space<vmem>>, %arg3: memref<1x1x2x16x16xf32, #tpu.memory_space<vmem>>, %arg4: memref<1x1x2x2x16x16xbf16, #tpu.memory_space<vmem>>, %arg5: memref<1x16x16xf32, #tpu.memory_space<vmem>>, %arg6: memref<32x16xbf16, #tpu.memory_space<vmem>>, %arg7: memref<16x32xbf16, #tpu.memory_space<vmem>>, %arg8: memref<1x1xf32, #tpu.memory_space<smem>>, %arg9: memref<1x2x2x16x16xf32, #tpu.memory_space<vmem>>) attributes {dimension_semantics = [#tpu.dimension_semantics<parallel>, #tpu.dimension_semantics<arbitrary>], iteration_bounds = array<i64: 2, 4>, scalar_prefetch = 0 : i64, scratch_operands = 0 : i64, tpu.core_type = #tpu.core_type<tc>, window_params = [{pipeline_mode = #tpu.pipeline_mode<synchronous>, transform_indices = @transform_0, window_bounds = array<i64: 1, 2, 2, 16, 16>}, {transform_indices = @transform_1, window_bounds = array<i64: 1, 1, 2, 16, 16>}, {transform_indices = @transform_2, window_bounds = array<i64: 1, 1, 2, 2, 16, 16>}, {pipeline_mode = #tpu.pipeline_mode<synchronous>, transform_indices = @transform_3, window_bounds = array<i64: 1, 16, 16>}, {pipeline_mode = #tpu.pipeline_mode<synchronous>, transform_indices = @transform_4, window_bounds = array<i64: 32, 16>}, {pipeline_mode = #tpu.pipeline_mode<synchronous>, transform_indices = @transform_5, window_bounds = array<i64: 16, 32>}, {transform_indices = @transform_6, window_bounds = array<i64: 1, 1>}, {pipeline_mode = #tpu.pipeline_mode<synchronous>, transform_indices = @transform_7, window_bounds = array<i64: 1, 2, 2, 16, 16>}]} {
    %c0_i32 = arith.constant 0 : i32
    %0 = arith.cmpi eq, %arg1, %c0_i32 : i32
    %1 = arith.extui %0 : i1 to i32
    %c0_i32_0 = arith.constant 0 : i32
    %2 = arith.cmpi ne, %1, %c0_i32_0 : i32
    scf.if %2 {
      %cst_64 = arith.constant 0.000000e+00 : f32
      %106 = vector.broadcast %cst_64 : f32 to vector<1x2x2x16x16xf32>
      %c0_65 = arith.constant 0 : index
      %c0_66 = arith.constant 0 : index
      %c0_67 = arith.constant 0 : index
      %c0_68 = arith.constant 0 : index
      %c0_69 = arith.constant 0 : index
      %107 = vector.load %arg9[%c0_65, %c0_66, %c0_67, %c0_68, %c0_69] : memref<1x2x2x16x16xf32, #tpu.memory_space<vmem>>, vector<1x2x2x16x16xf32>
      tpu.vector_store %arg9[%c0_65, %c0_66, %c0_67, %c0_68, %c0_69], %106 {strides = array<i32>} : memref<1x2x2x16x16xf32, #tpu.memory_space<vmem>>, vector<1x2x2x16x16xf32>,
    } else {
    }
    %c0 = arith.constant 0 : index
    %c0_1 = arith.constant 0 : index
    %c0_2 = arith.constant 0 : index
    %3 = vector.load %arg5[%c0, %c0_1, %c0_2] : memref<1x16x16xf32, #tpu.memory_space<vmem>>, vector<1x16x16xf32>
    %4 = vector.shape_cast %3 : vector<1x16x16xf32> to vector<16x16xf32>
    %c0_3 = arith.constant 0 : index
    %c0_4 = arith.constant 0 : index
    %5 = vector.load %arg6[%c0_3, %c0_4] : memref<32x16xbf16, #tpu.memory_space<vmem>>, vector<32x16xbf16>
    %c0_5 = arith.constant 0 : index
    %c0_6 = arith.constant 0 : index
    %6 = vector.load %arg7[%c0_5, %c0_6] : memref<16x32xbf16, #tpu.memory_space<vmem>>, vector<16x32xbf16>
    %c0_7 = arith.constant 0 : index
    %c0_8 = arith.constant 0 : index
    %c0_9 = arith.constant 0 : index
    %c0_10 = arith.constant 0 : index
    %c0_11 = arith.constant 0 : index
    %7 = vector.load %arg2[%c0_7, %c0_8, %c0_9, %c0_10, %c0_11] : memref<1x2x2x16x16xf32, #tpu.memory_space<vmem>>, vector<1x1x2x16x16xf32>
    %8 = vector.shape_cast %7 : vector<1x1x2x16x16xf32> to vector<2x16x16xf32>
    %c0_12 = arith.constant 0 : index
    %c1 = arith.constant 1 : index
    %c0_13 = arith.constant 0 : index
    %c0_14 = arith.constant 0 : index
    %c0_15 = arith.constant 0 : index
    %9 = vector.load %arg2[%c0_12, %c1, %c0_13, %c0_14, %c0_15] : memref<1x2x2x16x16xf32, #tpu.memory_space<vmem>>, vector<1x1x2x16x16xf32>
    %10 = vector.shape_cast %9 : vector<1x1x2x16x16xf32> to vector<2x16x16xf32>
    %c0_16 = arith.constant 0 : index
    %c0_17 = arith.constant 0 : index
    %c0_18 = arith.constant 0 : index
    %c0_19 = arith.constant 0 : index
    %c0_20 = arith.constant 0 : index
    %c0_21 = arith.constant 0 : index
    %11 = vector.load %arg4[%c0_16, %c0_17, %c0_18, %c0_19, %c0_20, %c0_21] : memref<1x1x2x2x16x16xbf16, #tpu.memory_space<vmem>>, vector<1x1x1x2x16x16xbf16>
    %12 = vector.shape_cast %11 : vector<1x1x1x2x16x16xbf16> to vector<2x16x16xbf16>
    %c0_22 = arith.constant 0 : index
    %c0_23 = arith.constant 0 : index
    %c1_24 = arith.constant 1 : index
    %c0_25 = arith.constant 0 : index
    %c0_26 = arith.constant 0 : index
    %c0_27 = arith.constant 0 : index
    %13 = vector.load %arg4[%c0_22, %c0_23, %c1_24, %c0_25, %c0_26, %c0_27] : memref<1x1x2x2x16x16xbf16, #tpu.memory_space<vmem>>, vector<1x1x1x2x16x16xbf16>
    %14 = vector.shape_cast %13 : vector<1x1x1x2x16x16xbf16> to vector<2x16x16xbf16>
    %c0_28 = arith.constant 0 : index
    %c0_29 = arith.constant 0 : index
    %c0_30 = arith.constant 0 : index
    %c0_31 = arith.constant 0 : index
    %c0_32 = arith.constant 0 : index
    %15 = vector.load %arg3[%c0_28, %c0_29, %c0_30, %c0_31, %c0_32] : memref<1x1x2x16x16xf32, #tpu.memory_space<vmem>>, vector<1x1x1x16x16xf32>
    %16 = vector.shape_cast %15 : vector<1x1x1x16x16xf32> to vector<16x16xf32>
    %c0_33 = arith.constant 0 : index
    %c0_34 = arith.constant 0 : index
    %c1_35 = arith.constant 1 : index
    %c0_36 = arith.constant 0 : index
    %c0_37 = arith.constant 0 : index
    %17 = vector.load %arg3[%c0_33, %c0_34, %c1_35, %c0_36, %c0_37] : memref<1x1x2x16x16xf32, #tpu.memory_space<vmem>>, vector<1x1x1x16x16xf32>
    %18 = vector.shape_cast %17 : vector<1x1x1x16x16xf32> to vector<16x16xf32>
    %19 = arith.extf %12 : vector<2x16x16xbf16> to vector<2x16x16xf32>
    %20 = arith.mulf %8, %19 : vector<2x16x16xf32>
    %21 = arith.extf %14 : vector<2x16x16xbf16> to vector<2x16x16xf32>
    %22 = arith.mulf %10, %21 : vector<2x16x16xf32>
    %23 = arith.subf %20, %22 : vector<2x16x16xf32>
    %cst = arith.constant dense<0.000000e+00> : vector<16x16xf32>
    %24 = vector.multi_reduction <add>, %23, %cst [0] : vector<2x16x16xf32> to vector<16x16xf32>
    %25 = arith.extf %14 : vector<2x16x16xbf16> to vector<2x16x16xf32>
    %26 = arith.mulf %8, %25 : vector<2x16x16xf32>
    %27 = arith.extf %12 : vector<2x16x16xbf16> to vector<2x16x16xf32>
    %28 = arith.mulf %10, %27 : vector<2x16x16xf32>
    %29 = arith.addf %26, %28 : vector<2x16x16xf32>
    %cst_38 = arith.constant dense<0.000000e+00> : vector<16x16xf32>
    %30 = vector.multi_reduction <add>, %29, %cst_38 [0] : vector<2x16x16xf32> to vector<16x16xf32>
    %31 = tpu.concatenate %24, %30 in 1 : vector<16x16xf32>, vector<16x16xf32> -> vector<16x32xf32>
    %32 = arith.truncf %31 : vector<16x32xf32> to vector<16x32xbf16>
    %cst_39 = arith.constant dense<0.000000e+00> : vector<32x32xf32>
    %33 = tpu.matmul %5, %32, %cst_39 {dimension_numbers = #tpu.dot_dimension_numbers<[1], [0], [0], [1], [0, 0, 1, 1], [], []>} : vector<32x16xbf16>, vector<16x32xbf16>, vector<32x32xf32> -> vector<32x32xf32>
    %34 = vector.extract_strided_slice %33 {offsets = [0, 0], sizes = [16, 16], strides = [1, 1]} : vector<32x32xf32> to vector<16x16xf32>
    %35 = vector.extract_strided_slice %33 {offsets = [0, 16], sizes = [16, 16], strides = [1, 1]} : vector<32x32xf32> to vector<16x16xf32>
    %36 = vector.extract_strided_slice %33 {offsets = [16, 0], sizes = [16, 16], strides = [1, 1]} : vector<32x32xf32> to vector<16x16xf32>
    %37 = vector.extract_strided_slice %33 {offsets = [16, 16], sizes = [16, 16], strides = [1, 1]} : vector<32x32xf32> to vector<16x16xf32>
    %38 = arith.subf %34, %37 : vector<16x16xf32>
    %39 = arith.addf %35, %36 : vector<16x16xf32>
    %40 = tpu.concatenate %38, %39 in 0 : vector<16x16xf32>, vector<16x16xf32> -> vector<32x16xf32>
    %41 = arith.truncf %40 : vector<32x16xf32> to vector<32x16xbf16>
    %cst_40 = arith.constant dense<0.000000e+00> : vector<32x32xf32>
    %42 = tpu.matmul %41, %6, %cst_40 {dimension_numbers = #tpu.dot_dimension_numbers<[1], [0], [0], [1], [0, 0, 1, 1], [], []>} : vector<32x16xbf16>, vector<16x32xbf16>, vector<32x32xf32> -> vector<32x32xf32>
    %43 = vector.extract_strided_slice %42 {offsets = [0, 0], sizes = [16, 16], strides = [1, 1]} : vector<32x32xf32> to vector<16x16xf32>
    %44 = vector.extract_strided_slice %42 {offsets = [0, 16], sizes = [16, 16], strides = [1, 1]} : vector<32x32xf32> to vector<16x16xf32>
    %45 = vector.extract_strided_slice %42 {offsets = [16, 0], sizes = [16, 16], strides = [1, 1]} : vector<32x32xf32> to vector<16x16xf32>
    %46 = vector.extract_strided_slice %42 {offsets = [16, 16], sizes = [16, 16], strides = [1, 1]} : vector<32x32xf32> to vector<16x16xf32>
    %47 = arith.subf %43, %46 : vector<16x16xf32>
    %48 = arith.addf %44, %45 : vector<16x16xf32>
    %49 = arith.mulf %47, %4 : vector<16x16xf32>
    %50 = arith.subf %49, %16 : vector<16x16xf32>
    %51 = arith.mulf %48, %4 : vector<16x16xf32>
    %52 = arith.subf %51, %18 : vector<16x16xf32>
    %53 = arith.mulf %50, %4 : vector<16x16xf32>
    %54 = arith.mulf %52, %4 : vector<16x16xf32>
    %55 = tpu.concatenate %53, %54 in 1 : vector<16x16xf32>, vector<16x16xf32> -> vector<16x32xf32>
    %56 = arith.truncf %55 : vector<16x32xf32> to vector<16x32xbf16>
    %cst_41 = arith.constant dense<0.000000e+00> : vector<32x32xf32>
    %57 = tpu.matmul %5, %56, %cst_41 {dimension_numbers = #tpu.dot_dimension_numbers<[1], [0], [0], [1], [0, 0, 1, 1], [], []>} : vector<32x16xbf16>, vector<16x32xbf16>, vector<32x32xf32> -> vector<32x32xf32>
    %58 = vector.extract_strided_slice %57 {offsets = [0, 0], sizes = [16, 16], strides = [1, 1]} : vector<32x32xf32> to vector<16x16xf32>
    %59 = vector.extract_strided_slice %57 {offsets = [0, 16], sizes = [16, 16], strides = [1, 1]} : vector<32x32xf32> to vector<16x16xf32>
    %60 = vector.extract_strided_slice %57 {offsets = [16, 0], sizes = [16, 16], strides = [1, 1]} : vector<32x32xf32> to vector<16x16xf32>
    %61 = vector.extract_strided_slice %57 {offsets = [16, 16], sizes = [16, 16], strides = [1, 1]} : vector<32x32xf32> to vector<16x16xf32>
    %62 = arith.addf %58, %61 : vector<16x16xf32>
    %63 = arith.subf %59, %60 : vector<16x16xf32>
    %64 = tpu.concatenate %62, %63 in 0 : vector<16x16xf32>, vector<16x16xf32> -> vector<32x16xf32>
    %65 = arith.truncf %64 : vector<32x16xf32> to vector<32x16xbf16>
    %cst_42 = arith.constant dense<0.000000e+00> : vector<32x32xf32>
    %66 = tpu.matmul %65, %6, %cst_42 {dimension_numbers = #tpu.dot_dimension_numbers<[1], [0], [0], [1], [0, 0, 1, 1], [], []>} : vector<32x16xbf16>, vector<16x32xbf16>, vector<32x32xf32> -> vector<32x32xf32>
    %67 = vector.extract_strided_slice %66 {offsets = [0, 0], sizes = [16, 16], strides = [1, 1]} : vector<32x32xf32> to vector<16x16xf32>
    %68 = vector.extract_strided_slice %66 {offsets = [0, 16], sizes = [16, 16], strides = [1, 1]} : vector<32x32xf32> to vector<16x16xf32>
    %69 = vector.extract_strided_slice %66 {offsets = [16, 0], sizes = [16, 16], strides = [1, 1]} : vector<32x32xf32> to vector<16x16xf32>
    %70 = vector.extract_strided_slice %66 {offsets = [16, 16], sizes = [16, 16], strides = [1, 1]} : vector<32x32xf32> to vector<16x16xf32>
    %71 = arith.addf %67, %70 : vector<16x16xf32>
    %72 = arith.subf %69, %68 : vector<16x16xf32>
    %c0_43 = arith.constant 0 : index
    %c0_44 = arith.constant 0 : index
    %c0_45 = arith.constant 0 : index
    %c0_46 = arith.constant 0 : index
    %c0_47 = arith.constant 0 : index
    %73 = vector.load %arg9[%c0_43, %c0_44, %c0_45, %c0_46, %c0_47] : memref<1x2x2x16x16xf32, #tpu.memory_space<vmem>>, vector<1x1x2x16x16xf32>
    %74 = vector.shape_cast %73 : vector<1x1x2x16x16xf32> to vector<2x16x16xf32>
    %75 = vector.shape_cast %71 : vector<16x16xf32> to vector<1x16x16xf32>
    %76 = arith.extf %12 : vector<2x16x16xbf16> to vector<2x16x16xf32>
    %77 = vector.broadcast %75 : vector<1x16x16xf32> to vector<2x16x16xf32>
    %78 = arith.mulf %77, %76 : vector<2x16x16xf32>
    %79 = vector.shape_cast %72 : vector<16x16xf32> to vector<1x16x16xf32>
    %80 = arith.extf %14 : vector<2x16x16xbf16> to vector<2x16x16xf32>
    %81 = vector.broadcast %79 : vector<1x16x16xf32> to vector<2x16x16xf32>
    %82 = arith.mulf %81, %80 : vector<2x16x16xf32>
    %83 = arith.addf %78, %82 : vector<2x16x16xf32>
    %84 = arith.addf %74, %83 : vector<2x16x16xf32>
    %c0_48 = arith.constant 0 : index
    %c0_49 = arith.constant 0 : index
    %c0_50 = arith.constant 0 : index
    %c0_51 = arith.constant 0 : index
    %c0_52 = arith.constant 0 : index
    %85 = vector.load %arg9[%c0_48, %c0_49, %c0_50, %c0_51, %c0_52] : memref<1x2x2x16x16xf32, #tpu.memory_space<vmem>>, vector<1x1x2x16x16xf32>
    %86 = vector.shape_cast %85 : vector<1x1x2x16x16xf32> to vector<2x16x16xf32>
    %87 = vector.shape_cast %84 : vector<2x16x16xf32> to vector<1x1x2x16x16xf32>
    tpu.vector_store %arg9[%c0_48, %c0_49, %c0_50, %c0_51, %c0_52], %87 {strides = array<i32>} : memref<1x2x2x16x16xf32, #tpu.memory_space<vmem>>, vector<1x1x2x16x16xf32>,
    %c0_53 = arith.constant 0 : index
    %c1_54 = arith.constant 1 : index
    %c0_55 = arith.constant 0 : index
    %c0_56 = arith.constant 0 : index
    %c0_57 = arith.constant 0 : index
    %88 = vector.load %arg9[%c0_53, %c1_54, %c0_55, %c0_56, %c0_57] : memref<1x2x2x16x16xf32, #tpu.memory_space<vmem>>, vector<1x1x2x16x16xf32>
    %89 = vector.shape_cast %88 : vector<1x1x2x16x16xf32> to vector<2x16x16xf32>
    %90 = vector.shape_cast %72 : vector<16x16xf32> to vector<1x16x16xf32>
    %91 = arith.extf %12 : vector<2x16x16xbf16> to vector<2x16x16xf32>
    %92 = vector.broadcast %90 : vector<1x16x16xf32> to vector<2x16x16xf32>
    %93 = arith.mulf %92, %91 : vector<2x16x16xf32>
    %94 = vector.shape_cast %71 : vector<16x16xf32> to vector<1x16x16xf32>
    %95 = arith.extf %14 : vector<2x16x16xbf16> to vector<2x16x16xf32>
    %96 = vector.broadcast %94 : vector<1x16x16xf32> to vector<2x16x16xf32>
    %97 = arith.mulf %96, %95 : vector<2x16x16xf32>
    %98 = arith.subf %93, %97 : vector<2x16x16xf32>
    %99 = arith.addf %89, %98 : vector<2x16x16xf32>
    %c0_58 = arith.constant 0 : index
    %c1_59 = arith.constant 1 : index
    %c0_60 = arith.constant 0 : index
    %c0_61 = arith.constant 0 : index
    %c0_62 = arith.constant 0 : index
    %100 = vector.load %arg9[%c0_58, %c1_59, %c0_60, %c0_61, %c0_62] : memref<1x2x2x16x16xf32, #tpu.memory_space<vmem>>, vector<1x1x2x16x16xf32>
    %101 = vector.shape_cast %100 : vector<1x1x2x16x16xf32> to vector<2x16x16xf32>
    %102 = vector.shape_cast %99 : vector<2x16x16xf32> to vector<1x1x2x16x16xf32>
    tpu.vector_store %arg9[%c0_58, %c1_59, %c0_60, %c0_61, %c0_62], %102 {strides = array<i32>} : memref<1x2x2x16x16xf32, #tpu.memory_space<vmem>>, vector<1x1x2x16x16xf32>,
    %c3_i32 = arith.constant 3 : i32
    %103 = arith.cmpi eq, %arg1, %c3_i32 : i32
    %104 = arith.extui %103 : i1 to i32
    %c0_i32_63 = arith.constant 0 : i32
    %105 = arith.cmpi ne, %104, %c0_i32_63 : i32
    scf.if %105 {
      %c0_64 = arith.constant 0 : index
      %c0_65 = arith.constant 0 : index
      %106 = memref.load %arg8[%c0_64, %c0_65] : memref<1x1xf32, #tpu.memory_space<smem>>
      %c0_66 = arith.constant 0 : index
      %c0_67 = arith.constant 0 : index
      %c0_68 = arith.constant 0 : index
      %c0_69 = arith.constant 0 : index
      %c0_70 = arith.constant 0 : index
      %107 = vector.load %arg9[%c0_66, %c0_67, %c0_68, %c0_69, %c0_70] : memref<1x2x2x16x16xf32, #tpu.memory_space<vmem>>, vector<1x1x2x16x16xf32>
      %108 = vector.shape_cast %107 : vector<1x1x2x16x16xf32> to vector<2x16x16xf32>
      %109 = vector.broadcast %106 : f32 to vector<2x16x16xf32>
      %110 = arith.mulf %109, %108 : vector<2x16x16xf32>
      %111 = arith.subf %8, %110 : vector<2x16x16xf32>
      %c0_71 = arith.constant 0 : index
      %c0_72 = arith.constant 0 : index
      %c0_73 = arith.constant 0 : index
      %c0_74 = arith.constant 0 : index
      %c0_75 = arith.constant 0 : index
      %112 = vector.load %arg9[%c0_71, %c0_72, %c0_73, %c0_74, %c0_75] : memref<1x2x2x16x16xf32, #tpu.memory_space<vmem>>, vector<1x1x2x16x16xf32>
      %113 = vector.shape_cast %112 : vector<1x1x2x16x16xf32> to vector<2x16x16xf32>
      %114 = vector.shape_cast %111 : vector<2x16x16xf32> to vector<1x1x2x16x16xf32>
      tpu.vector_store %arg9[%c0_71, %c0_72, %c0_73, %c0_74, %c0_75], %114 {strides = array<i32>} : memref<1x2x2x16x16xf32, #tpu.memory_space<vmem>>, vector<1x1x2x16x16xf32>,
      %c0_76 = arith.constant 0 : index
      %c1_77 = arith.constant 1 : index
      %c0_78 = arith.constant 0 : index
      %c0_79 = arith.constant 0 : index
      %c0_80 = arith.constant 0 : index
      %115 = vector.load %arg9[%c0_76, %c1_77, %c0_78, %c0_79, %c0_80] : memref<1x2x2x16x16xf32, #tpu.memory_space<vmem>>, vector<1x1x2x16x16xf32>
      %116 = vector.shape_cast %115 : vector<1x1x2x16x16xf32> to vector<2x16x16xf32>
      %117 = vector.broadcast %106 : f32 to vector<2x16x16xf32>
      %118 = arith.mulf %117, %116 : vector<2x16x16xf32>
      %119 = arith.subf %10, %118 : vector<2x16x16xf32>
      %c0_81 = arith.constant 0 : index
      %c1_82 = arith.constant 1 : index
      %c0_83 = arith.constant 0 : index
      %c0_84 = arith.constant 0 : index
      %c0_85 = arith.constant 0 : index
      %120 = vector.load %arg9[%c0_81, %c1_82, %c0_83, %c0_84, %c0_85] : memref<1x2x2x16x16xf32, #tpu.memory_space<vmem>>, vector<1x1x2x16x16xf32>
      %121 = vector.shape_cast %120 : vector<1x1x2x16x16xf32> to vector<2x16x16xf32>
      %122 = vector.shape_cast %119 : vector<2x16x16xf32> to vector<1x1x2x16x16xf32>
      tpu.vector_store %arg9[%c0_81, %c1_82, %c0_83, %c0_84, %c0_85], %122 {strides = array<i32>} : memref<1x2x2x16x16xf32, #tpu.memory_space<vmem>>, vector<1x1x2x16x16xf32>,
    } else {
    }
    return
  }
  func.func @transform_0(%arg0: i32, %arg1: i32) -> (i32, i32, i32, i32, i32) {
    %c0_i32 = arith.constant 0 : i32
    %c0_i32_0 = arith.constant 0 : i32
    %c0_i32_1 = arith.constant 0 : i32
    %c0_i32_2 = arith.constant 0 : i32
    %c0_i32_3 = arith.constant 0 : i32
    return %arg0, %c0_i32, %c0_i32_0, %c0_i32_1, %c0_i32_2 : i32, i32, i32, i32, i32
  }
  func.func @transform_1(%arg0: i32, %arg1: i32) -> (i32, i32, i32, i32, i32) {
    %c0_i32 = arith.constant 0 : i32
    %c0_i32_0 = arith.constant 0 : i32
    %c0_i32_1 = arith.constant 0 : i32
    %c0_i32_2 = arith.constant 0 : i32
    return %arg0, %arg1, %c0_i32, %c0_i32_0, %c0_i32_1 : i32, i32, i32, i32, i32
  }
  func.func @transform_2(%arg0: i32, %arg1: i32) -> (i32, i32, i32, i32, i32, i32) {
    %c0_i32 = arith.constant 0 : i32
    %c0_i32_0 = arith.constant 0 : i32
    %c0_i32_1 = arith.constant 0 : i32
    %c0_i32_2 = arith.constant 0 : i32
    %c0_i32_3 = arith.constant 0 : i32
    return %arg0, %arg1, %c0_i32, %c0_i32_0, %c0_i32_1, %c0_i32_2 : i32, i32, i32, i32, i32, i32
  }
  func.func @transform_3(%arg0: i32, %arg1: i32) -> (i32, i32, i32) {
    %c0_i32 = arith.constant 0 : i32
    %c0_i32_0 = arith.constant 0 : i32
    %c0_i32_1 = arith.constant 0 : i32
    return %arg0, %c0_i32, %c0_i32_0 : i32, i32, i32
  }
  func.func @transform_4(%arg0: i32, %arg1: i32) -> (i32, i32) {
    %c0_i32 = arith.constant 0 : i32
    %c0_i32_0 = arith.constant 0 : i32
    %c0_i32_1 = arith.constant 0 : i32
    return %c0_i32, %c0_i32_0 : i32, i32
  }
  func.func @transform_5(%arg0: i32, %arg1: i32) -> (i32, i32) {
    %c0_i32 = arith.constant 0 : i32
    %c0_i32_0 = arith.constant 0 : i32
    %c0_i32_1 = arith.constant 0 : i32
    return %c0_i32, %c0_i32_0 : i32, i32
  }
  func.func @transform_6(%arg0: i32, %arg1: i32) -> (i32, i32) {
    %c0_i32 = arith.constant 0 : i32
    %c0_i32_0 = arith.constant 0 : i32
    %c0_i32_1 = arith.constant 0 : i32
    return %c0_i32, %c0_i32_0 : i32, i32
  }
  func.func @transform_7(%arg0: i32, %arg1: i32) -> (i32, i32, i32, i32, i32) {
    %c0_i32 = arith.constant 0 : i32
    %c0_i32_0 = arith.constant 0 : i32
    %c0_i32_1 = arith.constant 0 : i32
    %c0_i32_2 = arith.constant 0 : i32
    %c0_i32_3 = arith.constant 0 : i32
    return %arg0, %c0_i32, %c0_i32_0, %c0_i32_1, %c0_i32_2 : i32, i32, i32, i32, i32
  }
}

module attributes {stable_mosaic.version = 11 : i64} {
  func.func @_data_gd_kernel(%arg0: i32, %arg1: i32, %arg2: memref<1x2x2x16x16xf32, #tpu.memory_space<vmem>>, %arg3: memref<1x1x2x16x16xf32, #tpu.memory_space<vmem>>, %arg4: memref<1x1x2x2x16x16xbf16, #tpu.memory_space<vmem>>, %arg5: memref<1x16x16xf32, #tpu.memory_space<vmem>>, %arg6: memref<32x16xbf16, #tpu.memory_space<vmem>>, %arg7: memref<16x32xbf16, #tpu.memory_space<vmem>>, %arg8: memref<1x1xf32, #tpu.memory_space<smem>>, %arg9: memref<1x2x2x16x16xf32, #tpu.memory_space<vmem>>) attributes {dimension_semantics = [#tpu.dimension_semantics<parallel>, #tpu.dimension_semantics<arbitrary>], iteration_bounds = array<i64: 2, 4>, scalar_prefetch = 0 : i64, scratch_operands = 0 : i64, tpu.core_type = #tpu.core_type<tc>, window_params = [{transform_indices = @transform_0, window_bounds = array<i64: 1, 2, 2, 16, 16>}, {transform_indices = @transform_1, window_bounds = array<i64: 1, 1, 2, 16, 16>}, {transform_indices = @transform_2, window_bounds = array<i64: 1, 1, 2, 2, 16, 16>}, {transform_indices = @transform_3, window_bounds = array<i64: 1, 16, 16>}, {pipeline_mode = #tpu.pipeline_mode<synchronous>, transform_indices = @transform_4, window_bounds = array<i64: 32, 16>}, {pipeline_mode = #tpu.pipeline_mode<synchronous>, transform_indices = @transform_5, window_bounds = array<i64: 16, 32>}, {transform_indices = @transform_6, window_bounds = array<i64: 1, 1>}, {transform_indices = @transform_7, window_bounds = array<i64: 1, 2, 2, 16, 16>}]} {
    %c0_i32 = arith.constant 0 : i32
    %0 = arith.cmpi eq, %arg1, %c0_i32 : i32
    %1 = arith.extui %0 : i1 to i32
    %c0_i32_0 = arith.constant 0 : i32
    %2 = arith.cmpi ne, %1, %c0_i32_0 : i32
    scf.if %2 {
      %cst_64 = arith.constant 0.000000e+00 : f32
      %106 = vector.broadcast %cst_64 : f32 to vector<1x2x2x16x16xf32>
      %c0_65 = arith.constant 0 : index
      %c0_66 = arith.constant 0 : index
      %c0_67 = arith.constant 0 : index
      %c0_68 = arith.constant 0 : index
      %c0_69 = arith.constant 0 : index
      %107 = vector.load %arg9[%c0_65, %c0_66, %c0_67, %c0_68, %c0_69] : memref<1x2x2x16x16xf32, #tpu.memory_space<vmem>>, vector<1x2x2x16x16xf32>
      tpu.vector_store %arg9[%c0_65, %c0_66, %c0_67, %c0_68, %c0_69], %106 {strides = array<i32>} : memref<1x2x2x16x16xf32, #tpu.memory_space<vmem>>, vector<1x2x2x16x16xf32>,
    } else {
    }
    %c0 = arith.constant 0 : index
    %c0_1 = arith.constant 0 : index
    %c0_2 = arith.constant 0 : index
    %3 = vector.load %arg5[%c0, %c0_1, %c0_2] : memref<1x16x16xf32, #tpu.memory_space<vmem>>, vector<1x16x16xf32>
    %4 = vector.shape_cast %3 : vector<1x16x16xf32> to vector<16x16xf32>
    %c0_3 = arith.constant 0 : index
    %c0_4 = arith.constant 0 : index
    %5 = vector.load %arg6[%c0_3, %c0_4] : memref<32x16xbf16, #tpu.memory_space<vmem>>, vector<32x16xbf16>
    %c0_5 = arith.constant 0 : index
    %c0_6 = arith.constant 0 : index
    %6 = vector.load %arg7[%c0_5, %c0_6] : memref<16x32xbf16, #tpu.memory_space<vmem>>, vector<16x32xbf16>
    %c0_7 = arith.constant 0 : index
    %c0_8 = arith.constant 0 : index
    %c0_9 = arith.constant 0 : index
    %c0_10 = arith.constant 0 : index
    %c0_11 = arith.constant 0 : index
    %7 = vector.load %arg2[%c0_7, %c0_8, %c0_9, %c0_10, %c0_11] : memref<1x2x2x16x16xf32, #tpu.memory_space<vmem>>, vector<1x1x2x16x16xf32>
    %8 = vector.shape_cast %7 : vector<1x1x2x16x16xf32> to vector<2x16x16xf32>
    %c0_12 = arith.constant 0 : index
    %c1 = arith.constant 1 : index
    %c0_13 = arith.constant 0 : index
    %c0_14 = arith.constant 0 : index
    %c0_15 = arith.constant 0 : index
    %9 = vector.load %arg2[%c0_12, %c1, %c0_13, %c0_14, %c0_15] : memref<1x2x2x16x16xf32, #tpu.memory_space<vmem>>, vector<1x1x2x16x16xf32>
    %10 = vector.shape_cast %9 : vector<1x1x2x16x16xf32> to vector<2x16x16xf32>
    %c0_16 = arith.constant 0 : index
    %c0_17 = arith.constant 0 : index
    %c0_18 = arith.constant 0 : index
    %c0_19 = arith.constant 0 : index
    %c0_20 = arith.constant 0 : index
    %c0_21 = arith.constant 0 : index
    %11 = vector.load %arg4[%c0_16, %c0_17, %c0_18, %c0_19, %c0_20, %c0_21] : memref<1x1x2x2x16x16xbf16, #tpu.memory_space<vmem>>, vector<1x1x1x2x16x16xbf16>
    %12 = vector.shape_cast %11 : vector<1x1x1x2x16x16xbf16> to vector<2x16x16xbf16>
    %c0_22 = arith.constant 0 : index
    %c0_23 = arith.constant 0 : index
    %c1_24 = arith.constant 1 : index
    %c0_25 = arith.constant 0 : index
    %c0_26 = arith.constant 0 : index
    %c0_27 = arith.constant 0 : index
    %13 = vector.load %arg4[%c0_22, %c0_23, %c1_24, %c0_25, %c0_26, %c0_27] : memref<1x1x2x2x16x16xbf16, #tpu.memory_space<vmem>>, vector<1x1x1x2x16x16xbf16>
    %14 = vector.shape_cast %13 : vector<1x1x1x2x16x16xbf16> to vector<2x16x16xbf16>
    %c0_28 = arith.constant 0 : index
    %c0_29 = arith.constant 0 : index
    %c0_30 = arith.constant 0 : index
    %c0_31 = arith.constant 0 : index
    %c0_32 = arith.constant 0 : index
    %15 = vector.load %arg3[%c0_28, %c0_29, %c0_30, %c0_31, %c0_32] : memref<1x1x2x16x16xf32, #tpu.memory_space<vmem>>, vector<1x1x1x16x16xf32>
    %16 = vector.shape_cast %15 : vector<1x1x1x16x16xf32> to vector<16x16xf32>
    %c0_33 = arith.constant 0 : index
    %c0_34 = arith.constant 0 : index
    %c1_35 = arith.constant 1 : index
    %c0_36 = arith.constant 0 : index
    %c0_37 = arith.constant 0 : index
    %17 = vector.load %arg3[%c0_33, %c0_34, %c1_35, %c0_36, %c0_37] : memref<1x1x2x16x16xf32, #tpu.memory_space<vmem>>, vector<1x1x1x16x16xf32>
    %18 = vector.shape_cast %17 : vector<1x1x1x16x16xf32> to vector<16x16xf32>
    %19 = arith.extf %12 : vector<2x16x16xbf16> to vector<2x16x16xf32>
    %20 = arith.mulf %8, %19 : vector<2x16x16xf32>
    %21 = arith.extf %14 : vector<2x16x16xbf16> to vector<2x16x16xf32>
    %22 = arith.mulf %10, %21 : vector<2x16x16xf32>
    %23 = arith.subf %20, %22 : vector<2x16x16xf32>
    %cst = arith.constant dense<0.000000e+00> : vector<16x16xf32>
    %24 = vector.multi_reduction <add>, %23, %cst [0] : vector<2x16x16xf32> to vector<16x16xf32>
    %25 = arith.extf %14 : vector<2x16x16xbf16> to vector<2x16x16xf32>
    %26 = arith.mulf %8, %25 : vector<2x16x16xf32>
    %27 = arith.extf %12 : vector<2x16x16xbf16> to vector<2x16x16xf32>
    %28 = arith.mulf %10, %27 : vector<2x16x16xf32>
    %29 = arith.addf %26, %28 : vector<2x16x16xf32>
    %cst_38 = arith.constant dense<0.000000e+00> : vector<16x16xf32>
    %30 = vector.multi_reduction <add>, %29, %cst_38 [0] : vector<2x16x16xf32> to vector<16x16xf32>
    %31 = tpu.concatenate %24, %30 in 1 : vector<16x16xf32>, vector<16x16xf32> -> vector<16x32xf32>
    %32 = arith.truncf %31 : vector<16x32xf32> to vector<16x32xbf16>
    %cst_39 = arith.constant dense<0.000000e+00> : vector<32x32xf32>
    %33 = tpu.matmul %5, %32, %cst_39 {dimension_numbers = #tpu.dot_dimension_numbers<[1], [0], [0], [1], [0, 0, 1, 1], [], []>} : vector<32x16xbf16>, vector<16x32xbf16>, vector<32x32xf32> -> vector<32x32xf32>
    %34 = vector.extract_strided_slice %33 {offsets = [0, 0], sizes = [16, 16], strides = [1, 1]} : vector<32x32xf32> to vector<16x16xf32>
    %35 = vector.extract_strided_slice %33 {offsets = [0, 16], sizes = [16, 16], strides = [1, 1]} : vector<32x32xf32> to vector<16x16xf32>
    %36 = vector.extract_strided_slice %33 {offsets = [16, 0], sizes = [16, 16], strides = [1, 1]} : vector<32x32xf32> to vector<16x16xf32>
    %37 = vector.extract_strided_slice %33 {offsets = [16, 16], sizes = [16, 16], strides = [1, 1]} : vector<32x32xf32> to vector<16x16xf32>
    %38 = arith.subf %34, %37 : vector<16x16xf32>
    %39 = arith.addf %35, %36 : vector<16x16xf32>
    %40 = tpu.concatenate %38, %39 in 0 : vector<16x16xf32>, vector<16x16xf32> -> vector<32x16xf32>
    %41 = arith.truncf %40 : vector<32x16xf32> to vector<32x16xbf16>
    %cst_40 = arith.constant dense<0.000000e+00> : vector<32x32xf32>
    %42 = tpu.matmul %41, %6, %cst_40 {dimension_numbers = #tpu.dot_dimension_numbers<[1], [0], [0], [1], [0, 0, 1, 1], [], []>} : vector<32x16xbf16>, vector<16x32xbf16>, vector<32x32xf32> -> vector<32x32xf32>
    %43 = vector.extract_strided_slice %42 {offsets = [0, 0], sizes = [16, 16], strides = [1, 1]} : vector<32x32xf32> to vector<16x16xf32>
    %44 = vector.extract_strided_slice %42 {offsets = [0, 16], sizes = [16, 16], strides = [1, 1]} : vector<32x32xf32> to vector<16x16xf32>
    %45 = vector.extract_strided_slice %42 {offsets = [16, 0], sizes = [16, 16], strides = [1, 1]} : vector<32x32xf32> to vector<16x16xf32>
    %46 = vector.extract_strided_slice %42 {offsets = [16, 16], sizes = [16, 16], strides = [1, 1]} : vector<32x32xf32> to vector<16x16xf32>
    %47 = arith.subf %43, %46 : vector<16x16xf32>
    %48 = arith.addf %44, %45 : vector<16x16xf32>
    %49 = arith.mulf %47, %4 : vector<16x16xf32>
    %50 = arith.subf %49, %16 : vector<16x16xf32>
    %51 = arith.mulf %48, %4 : vector<16x16xf32>
    %52 = arith.subf %51, %18 : vector<16x16xf32>
    %53 = arith.mulf %50, %4 : vector<16x16xf32>
    %54 = arith.mulf %52, %4 : vector<16x16xf32>
    %55 = tpu.concatenate %53, %54 in 1 : vector<16x16xf32>, vector<16x16xf32> -> vector<16x32xf32>
    %56 = arith.truncf %55 : vector<16x32xf32> to vector<16x32xbf16>
    %cst_41 = arith.constant dense<0.000000e+00> : vector<32x32xf32>
    %57 = tpu.matmul %5, %56, %cst_41 {dimension_numbers = #tpu.dot_dimension_numbers<[1], [0], [0], [1], [0, 0, 1, 1], [], []>} : vector<32x16xbf16>, vector<16x32xbf16>, vector<32x32xf32> -> vector<32x32xf32>
    %58 = vector.extract_strided_slice %57 {offsets = [0, 0], sizes = [16, 16], strides = [1, 1]} : vector<32x32xf32> to vector<16x16xf32>
    %59 = vector.extract_strided_slice %57 {offsets = [0, 16], sizes = [16, 16], strides = [1, 1]} : vector<32x32xf32> to vector<16x16xf32>
    %60 = vector.extract_strided_slice %57 {offsets = [16, 0], sizes = [16, 16], strides = [1, 1]} : vector<32x32xf32> to vector<16x16xf32>
    %61 = vector.extract_strided_slice %57 {offsets = [16, 16], sizes = [16, 16], strides = [1, 1]} : vector<32x32xf32> to vector<16x16xf32>
    %62 = arith.addf %58, %61 : vector<16x16xf32>
    %63 = arith.subf %59, %60 : vector<16x16xf32>
    %64 = tpu.concatenate %62, %63 in 0 : vector<16x16xf32>, vector<16x16xf32> -> vector<32x16xf32>
    %65 = arith.truncf %64 : vector<32x16xf32> to vector<32x16xbf16>
    %cst_42 = arith.constant dense<0.000000e+00> : vector<32x32xf32>
    %66 = tpu.matmul %65, %6, %cst_42 {dimension_numbers = #tpu.dot_dimension_numbers<[1], [0], [0], [1], [0, 0, 1, 1], [], []>} : vector<32x16xbf16>, vector<16x32xbf16>, vector<32x32xf32> -> vector<32x32xf32>
    %67 = vector.extract_strided_slice %66 {offsets = [0, 0], sizes = [16, 16], strides = [1, 1]} : vector<32x32xf32> to vector<16x16xf32>
    %68 = vector.extract_strided_slice %66 {offsets = [0, 16], sizes = [16, 16], strides = [1, 1]} : vector<32x32xf32> to vector<16x16xf32>
    %69 = vector.extract_strided_slice %66 {offsets = [16, 0], sizes = [16, 16], strides = [1, 1]} : vector<32x32xf32> to vector<16x16xf32>
    %70 = vector.extract_strided_slice %66 {offsets = [16, 16], sizes = [16, 16], strides = [1, 1]} : vector<32x32xf32> to vector<16x16xf32>
    %71 = arith.addf %67, %70 : vector<16x16xf32>
    %72 = arith.subf %69, %68 : vector<16x16xf32>
    %c0_43 = arith.constant 0 : index
    %c0_44 = arith.constant 0 : index
    %c0_45 = arith.constant 0 : index
    %c0_46 = arith.constant 0 : index
    %c0_47 = arith.constant 0 : index
    %73 = vector.load %arg9[%c0_43, %c0_44, %c0_45, %c0_46, %c0_47] : memref<1x2x2x16x16xf32, #tpu.memory_space<vmem>>, vector<1x1x2x16x16xf32>
    %74 = vector.shape_cast %73 : vector<1x1x2x16x16xf32> to vector<2x16x16xf32>
    %75 = vector.shape_cast %71 : vector<16x16xf32> to vector<1x16x16xf32>
    %76 = arith.extf %12 : vector<2x16x16xbf16> to vector<2x16x16xf32>
    %77 = vector.broadcast %75 : vector<1x16x16xf32> to vector<2x16x16xf32>
    %78 = arith.mulf %77, %76 : vector<2x16x16xf32>
    %79 = vector.shape_cast %72 : vector<16x16xf32> to vector<1x16x16xf32>
    %80 = arith.extf %14 : vector<2x16x16xbf16> to vector<2x16x16xf32>
    %81 = vector.broadcast %79 : vector<1x16x16xf32> to vector<2x16x16xf32>
    %82 = arith.mulf %81, %80 : vector<2x16x16xf32>
    %83 = arith.addf %78, %82 : vector<2x16x16xf32>
    %84 = arith.addf %74, %83 : vector<2x16x16xf32>
    %c0_48 = arith.constant 0 : index
    %c0_49 = arith.constant 0 : index
    %c0_50 = arith.constant 0 : index
    %c0_51 = arith.constant 0 : index
    %c0_52 = arith.constant 0 : index
    %85 = vector.load %arg9[%c0_48, %c0_49, %c0_50, %c0_51, %c0_52] : memref<1x2x2x16x16xf32, #tpu.memory_space<vmem>>, vector<1x1x2x16x16xf32>
    %86 = vector.shape_cast %85 : vector<1x1x2x16x16xf32> to vector<2x16x16xf32>
    %87 = vector.shape_cast %84 : vector<2x16x16xf32> to vector<1x1x2x16x16xf32>
    tpu.vector_store %arg9[%c0_48, %c0_49, %c0_50, %c0_51, %c0_52], %87 {strides = array<i32>} : memref<1x2x2x16x16xf32, #tpu.memory_space<vmem>>, vector<1x1x2x16x16xf32>,
    %c0_53 = arith.constant 0 : index
    %c1_54 = arith.constant 1 : index
    %c0_55 = arith.constant 0 : index
    %c0_56 = arith.constant 0 : index
    %c0_57 = arith.constant 0 : index
    %88 = vector.load %arg9[%c0_53, %c1_54, %c0_55, %c0_56, %c0_57] : memref<1x2x2x16x16xf32, #tpu.memory_space<vmem>>, vector<1x1x2x16x16xf32>
    %89 = vector.shape_cast %88 : vector<1x1x2x16x16xf32> to vector<2x16x16xf32>
    %90 = vector.shape_cast %72 : vector<16x16xf32> to vector<1x16x16xf32>
    %91 = arith.extf %12 : vector<2x16x16xbf16> to vector<2x16x16xf32>
    %92 = vector.broadcast %90 : vector<1x16x16xf32> to vector<2x16x16xf32>
    %93 = arith.mulf %92, %91 : vector<2x16x16xf32>
    %94 = vector.shape_cast %71 : vector<16x16xf32> to vector<1x16x16xf32>
    %95 = arith.extf %14 : vector<2x16x16xbf16> to vector<2x16x16xf32>
    %96 = vector.broadcast %94 : vector<1x16x16xf32> to vector<2x16x16xf32>
    %97 = arith.mulf %96, %95 : vector<2x16x16xf32>
    %98 = arith.subf %93, %97 : vector<2x16x16xf32>
    %99 = arith.addf %89, %98 : vector<2x16x16xf32>
    %c0_58 = arith.constant 0 : index
    %c1_59 = arith.constant 1 : index
    %c0_60 = arith.constant 0 : index
    %c0_61 = arith.constant 0 : index
    %c0_62 = arith.constant 0 : index
    %100 = vector.load %arg9[%c0_58, %c1_59, %c0_60, %c0_61, %c0_62] : memref<1x2x2x16x16xf32, #tpu.memory_space<vmem>>, vector<1x1x2x16x16xf32>
    %101 = vector.shape_cast %100 : vector<1x1x2x16x16xf32> to vector<2x16x16xf32>
    %102 = vector.shape_cast %99 : vector<2x16x16xf32> to vector<1x1x2x16x16xf32>
    tpu.vector_store %arg9[%c0_58, %c1_59, %c0_60, %c0_61, %c0_62], %102 {strides = array<i32>} : memref<1x2x2x16x16xf32, #tpu.memory_space<vmem>>, vector<1x1x2x16x16xf32>,
    %c3_i32 = arith.constant 3 : i32
    %103 = arith.cmpi eq, %arg1, %c3_i32 : i32
    %104 = arith.extui %103 : i1 to i32
    %c0_i32_63 = arith.constant 0 : i32
    %105 = arith.cmpi ne, %104, %c0_i32_63 : i32
    scf.if %105 {
      %c0_64 = arith.constant 0 : index
      %c0_65 = arith.constant 0 : index
      %106 = memref.load %arg8[%c0_64, %c0_65] : memref<1x1xf32, #tpu.memory_space<smem>>
      %c0_66 = arith.constant 0 : index
      %c0_67 = arith.constant 0 : index
      %c0_68 = arith.constant 0 : index
      %c0_69 = arith.constant 0 : index
      %c0_70 = arith.constant 0 : index
      %107 = vector.load %arg9[%c0_66, %c0_67, %c0_68, %c0_69, %c0_70] : memref<1x2x2x16x16xf32, #tpu.memory_space<vmem>>, vector<1x1x2x16x16xf32>
      %108 = vector.shape_cast %107 : vector<1x1x2x16x16xf32> to vector<2x16x16xf32>
      %109 = vector.broadcast %106 : f32 to vector<2x16x16xf32>
      %110 = arith.mulf %109, %108 : vector<2x16x16xf32>
      %111 = arith.subf %8, %110 : vector<2x16x16xf32>
      %c0_71 = arith.constant 0 : index
      %c0_72 = arith.constant 0 : index
      %c0_73 = arith.constant 0 : index
      %c0_74 = arith.constant 0 : index
      %c0_75 = arith.constant 0 : index
      %112 = vector.load %arg9[%c0_71, %c0_72, %c0_73, %c0_74, %c0_75] : memref<1x2x2x16x16xf32, #tpu.memory_space<vmem>>, vector<1x1x2x16x16xf32>
      %113 = vector.shape_cast %112 : vector<1x1x2x16x16xf32> to vector<2x16x16xf32>
      %114 = vector.shape_cast %111 : vector<2x16x16xf32> to vector<1x1x2x16x16xf32>
      tpu.vector_store %arg9[%c0_71, %c0_72, %c0_73, %c0_74, %c0_75], %114 {strides = array<i32>} : memref<1x2x2x16x16xf32, #tpu.memory_space<vmem>>, vector<1x1x2x16x16xf32>,
      %c0_76 = arith.constant 0 : index
      %c1_77 = arith.constant 1 : index
      %c0_78 = arith.constant 0 : index
      %c0_79 = arith.constant 0 : index
      %c0_80 = arith.constant 0 : index
      %115 = vector.load %arg9[%c0_76, %c1_77, %c0_78, %c0_79, %c0_80] : memref<1x2x2x16x16xf32, #tpu.memory_space<vmem>>, vector<1x1x2x16x16xf32>
      %116 = vector.shape_cast %115 : vector<1x1x2x16x16xf32> to vector<2x16x16xf32>
      %117 = vector.broadcast %106 : f32 to vector<2x16x16xf32>
      %118 = arith.mulf %117, %116 : vector<2x16x16xf32>
      %119 = arith.subf %10, %118 : vector<2x16x16xf32>
      %c0_81 = arith.constant 0 : index
      %c1_82 = arith.constant 1 : index
      %c0_83 = arith.constant 0 : index
      %c0_84 = arith.constant 0 : index
      %c0_85 = arith.constant 0 : index
      %120 = vector.load %arg9[%c0_81, %c1_82, %c0_83, %c0_84, %c0_85] : memref<1x2x2x16x16xf32, #tpu.memory_space<vmem>>, vector<1x1x2x16x16xf32>
      %121 = vector.shape_cast %120 : vector<1x1x2x16x16xf32> to vector<2x16x16xf32>
      %122 = vector.shape_cast %119 : vector<2x16x16xf32> to vector<1x1x2x16x16xf32>
      tpu.vector_store %arg9[%c0_81, %c1_82, %c0_83, %c0_84, %c0_85], %122 {strides = array<i32>} : memref<1x2x2x16x16xf32, #tpu.memory_space<vmem>>, vector<1x1x2x16x16xf32>,
    } else {
    }
    return
  }
  func.func @transform_0(%arg0: i32, %arg1: i32) -> (i32, i32, i32, i32, i32) {
    %c0_i32 = arith.constant 0 : i32
    %c0_i32_0 = arith.constant 0 : i32
    %c0_i32_1 = arith.constant 0 : i32
    %c0_i32_2 = arith.constant 0 : i32
    %c0_i32_3 = arith.constant 0 : i32
    return %arg0, %c0_i32, %c0_i32_0, %c0_i32_1, %c0_i32_2 : i32, i32, i32, i32, i32
  }
  func.func @transform_1(%arg0: i32, %arg1: i32) -> (i32, i32, i32, i32, i32) {
    %c0_i32 = arith.constant 0 : i32
    %c0_i32_0 = arith.constant 0 : i32
    %c0_i32_1 = arith.constant 0 : i32
    %c0_i32_2 = arith.constant 0 : i32
    return %arg0, %arg1, %c0_i32, %c0_i32_0, %c0_i32_1 : i32, i32, i32, i32, i32
  }
  func.func @transform_2(%arg0: i32, %arg1: i32) -> (i32, i32, i32, i32, i32, i32) {
    %c0_i32 = arith.constant 0 : i32
    %c0_i32_0 = arith.constant 0 : i32
    %c0_i32_1 = arith.constant 0 : i32
    %c0_i32_2 = arith.constant 0 : i32
    %c0_i32_3 = arith.constant 0 : i32
    return %arg0, %arg1, %c0_i32, %c0_i32_0, %c0_i32_1, %c0_i32_2 : i32, i32, i32, i32, i32, i32
  }
  func.func @transform_3(%arg0: i32, %arg1: i32) -> (i32, i32, i32) {
    %c0_i32 = arith.constant 0 : i32
    %c0_i32_0 = arith.constant 0 : i32
    %c0_i32_1 = arith.constant 0 : i32
    return %arg0, %c0_i32, %c0_i32_0 : i32, i32, i32
  }
  func.func @transform_4(%arg0: i32, %arg1: i32) -> (i32, i32) {
    %c0_i32 = arith.constant 0 : i32
    %c0_i32_0 = arith.constant 0 : i32
    %c0_i32_1 = arith.constant 0 : i32
    return %c0_i32, %c0_i32_0 : i32, i32
  }
  func.func @transform_5(%arg0: i32, %arg1: i32) -> (i32, i32) {
    %c0_i32 = arith.constant 0 : i32
    %c0_i32_0 = arith.constant 0 : i32
    %c0_i32_1 = arith.constant 0 : i32
    return %c0_i32, %c0_i32_0 : i32, i32
  }
  func.func @transform_6(%arg0: i32, %arg1: i32) -> (i32, i32) {
    %c0_i32 = arith.constant 0 : i32
    %c0_i32_0 = arith.constant 0 : i32
    %c0_i32_1 = arith.constant 0 : i32
    return %c0_i32, %c0_i32_0 : i32, i32
  }
  func.func @transform_7(%arg0: i32, %arg1: i32) -> (i32, i32, i32, i32, i32) {
    %c0_i32 = arith.constant 0 : i32
    %c0_i32_0 = arith.constant 0 : i32
    %c0_i32_1 = arith.constant 0 : i32
    %c0_i32_2 = arith.constant 0 : i32
    %c0_i32_3 = arith.constant 0 : i32
    return %arg0, %c0_i32, %c0_i32_0, %c0_i32_1, %c0_i32_2 : i32, i32, i32, i32, i32
  }
}

</mosaic_0001>

<llo_original>
// kernel: _run.1
$region0: #{_run.1}
  #allocation0 [shape = 'u32[]', space=smem, size = 0x4, offset = 0x4, fixed_abs, tag = 'smem constant byte address 0x4 - core index']
  #allocation1 [shape = 'u32[144,128]{1,0:T(1,128)}', space=vmem, size = 0x12000, scoped, tag = 'internal scratch']
  #allocation2 [shape = 'f32[1,1]{1,0:T(1,128)S(6)}', space=smem, size = 0x200, scoped, tag = 'scoped memory for _run.1']
  %s0 = inlined_call_operand.hbm [shape: f32[2,2,2,16,16], index: 0, kind: input, shape index: {}]
  %s1 = inlined_call_operand.hbm [shape: f32[2,4,2,16,16], index: 1, kind: input, shape index: {}]
  %s2 = inlined_call_operand.hbm [shape: bf16[2,4,2,2,16,16], index: 2, kind: input, shape index: {}]
  %s3 = inlined_call_operand.vmem [shape: f32[2,16,16], index: 3, kind: input, shape index: {}]
  %s4 = inlined_call_operand.vmem [shape: bf16[32,16], index: 4, kind: input, shape index: {}]
  %s5 = inlined_call_operand.vmem [shape: bf16[16,32], index: 5, kind: input, shape index: {}]
  %s6 = inlined_call_operand.<no memory space> [shape: f32[1,1], index: 6, kind: input, shape index: {}]
  %s7 = inlined_call_operand.hbm [shape: f32[2,2,2,16,16], index: 7, kind: output, shape index: {}]
  %s8 = sld [smem:[#allocation0]]
  $region81: #{_run.1} parent=0
    _
  %s10 = ssub.s32 1, %s8
  %s11 = scalar_select 0, %s10, %s8
  %12 = sst [smem:[#allocation2]] %s6
  $region1: #{_run.1} parent=0
    #allocation3 [shape = 'u8[32768]{0}', space=vmem, size = 0x8000, scoped, tag = 'input window, operand 0, single buffered']
    #allocation4 [shape = 's32[2]{0}', space=sflag, size = 0x8, scoped, tag = 'scoped memory for _run.1']
    #allocation5 [shape = 's32[2]{0}', space=sflag, size = 0x8, scoped, tag = 'scoped memory for _run.1']
    #allocation6 [shape = 'u8[32768]{0}', space=vmem, size = 0x8000, scoped, tag = 'input window, operand 1']
    #allocation7 [shape = 's32[2]{0}', space=sflag, size = 0x8, scoped, tag = 'scoped memory for _run.1']
    #allocation8 [shape = 'u8[32768]{0}', space=vmem, size = 0x8000, scoped, tag = 'input window, operand 2']
    #allocation9 [shape = 'u8[32768]{0}', space=vmem, size = 0x8000, scoped, tag = 'output window, operand 0, single buffered']
    %13 = vsyncpa [#allocation4], 0
    %14 = vsyncpa [#allocation7], 0
    %s15 = scalar_lea.sflag [#allocation7], 1
    %16 = vsyncpa %s15, 0
    %17 = vsyncpa [#allocation5], 0
    loop: start=0, step=1, limit=10
    $region2: #{_run.1} parent=1 // loop_pre_header
      _
    $region3: #{_run.1} parent=1 // loop_header
      %s19 = sphi 0, %s23
      %p20 = scmp.ge.s32.totalorder %s19, 10
      %s26 = sphi 0, %s38
      %s27 = sphi 0, %s34
      %s28 = sphi 0, %s26
      %s29 = sphi 0, %s27
      %s30 = sphi 0, %s28
      %s31 = sphi 0, %s29
      %s41 = sphi 0, %s43
      %s44 = sphi 0, %s41
      %s45 = sphi 0, %s44
      %s61 = sphi 0, %s45
      %s69 = sphi 0, %s71
      %s72 = sphi 0, %s69
      %s73 = sphi 0, %s72
      %s89 = sphi 0, %s73
      %s97 = sphi 0, %s99
      %s100 = sphi 0, %s97
      %s101 = sphi 0, %s100
      %s117 = sphi 0, %s101
      %s123 = sphi 0, %s125
      %s126 = sphi 0, %s123
      %s127 = sphi 0, %s126
      %s143 = sphi 0, %s127
      %s147 = sphi 0, %s147
      %s149 = sphi 0, %s147
      %s150 = sphi 0, %s149
      %s164 = sphi 0, %s150
      %s168 = sphi 0, %s168
      %s170 = sphi 0, %s168
      %s171 = sphi 0, %s170
      %s185 = sphi 0, %s171
      %s189 = sphi 0, %s189
      %s191 = sphi 0, %s189
      %s192 = sphi 0, %s191
      %s206 = sphi 0, %s192
      %s212 = sphi 0, %s214
      %s215 = sphi 0, %s212
      %s216 = sphi 0, %s215
      %s232 = sphi 0, %s216
    $region4: #{_run.1} parent=1 // loop_header_branch
      %22 = sbr.rel (%p20) target = $region8
    $region5: #{_run.1} parent=1 // loop_body
      %s24 = ssub.s32 %s19, 1
      %s25 = ssub.s32 %s19, 2
      %s32 = sadd.s32 1, %s27
      %p33 = scmp.ge.s32.totalorder %s32, 4
      %s34 = scalar_select %p33, 0, %s32
      %s35 = sadd.s32 1, %s26
      %s36 = scalar_select %p33, %s35, %s26
      %p37 = scmp.ge.s32.totalorder %s36, 2
      %s38 = scalar_select %p37, 0, %s36
      %s39 = ssub.s32 %s26, %s38
      %p40 = scmp.eq.s32.totalorder %s39, 0
      %s42 = sadd.s32 %s41, 1
      %s43 = scalar_select %p40, %s41, %s42
      %p46 = pneg %p40
      %p47 = scmp.eq.s32.totalorder %s19, 7
      %p48 = por %p46, %p47
      %p49 = scmp.ne.s32.totalorder %s41, %s44
      %p50 = scmp.eq.s32.totalorder %s19, 0
      %p51 = por %p49, %p50
      %p52 = scmp.ne.s32.totalorder %s41, %s44
      %p53 = scmp.eq.s32.totalorder %s24, 7
      %p54 = por %p52, %p53
      %p55 = scmp.ne.s32.totalorder %s44, %s45
      %p56 = scmp.eq.s32.totalorder %s24, 0
      %p57 = por %p55, %p56
      %p58 = scmp.ne.s32.totalorder %s44, %s45
      %p59 = scmp.eq.s32.totalorder %s25, 7
      %p60 = por %p58, %p59
      %p62 = scmp.ne.s32.totalorder %s45, %s61
      %p63 = scmp.eq.s32.totalorder %s25, 0
      %p64 = por %p62, %p63
      %s65 = ssub.s32 %s26, %s38
      %s66 = ssub.s32 %s27, %s34
      %s67 = sor.u32 %s65, %s66
      %p68 = scmp.eq.s32.totalorder %s67, 0
      %s70 = sadd.s32 %s69, 1
      %s71 = scalar_select %p68, %s69, %s70
      %p74 = pneg %p68
      %p75 = scmp.eq.s32.totalorder %s19, 7
      %p76 = por %p74, %p75
      %p77 = scmp.ne.s32.totalorder %s69, %s72
      %p78 = scmp.eq.s32.totalorder %s19, 0
      %p79 = por %p77, %p78
      %p80 = scmp.ne.s32.totalorder %s69, %s72
      %p81 = scmp.eq.s32.totalorder %s24, 7
      %p82 = por %p80, %p81
      %p83 = scmp.ne.s32.totalorder %s72, %s73
      %p84 = scmp.eq.s32.totalorder %s24, 0
      %p85 = por %p83, %p84
      %p86 = scmp.ne.s32.totalorder %s72, %s73
      %p87 = scmp.eq.s32.totalorder %s25, 7
      %p88 = por %p86, %p87
      %p90 = scmp.ne.s32.totalorder %s73, %s89
      %p91 = scmp.eq.s32.totalorder %s25, 0
      %p92 = por %p90, %p91
      %s93 = ssub.s32 %s26, %s38
      %s94 = ssub.s32 %s27, %s34
      %s95 = sor.u32 %s93, %s94
      %p96 = scmp.eq.s32.totalorder %s95, 0
      %s98 = sadd.s32 %s97, 1
      %s99 = scalar_select %p96, %s97, %s98
      %p102 = pneg %p96
      %p103 = scmp.eq.s32.totalorder %s19, 7
      %p104 = por %p102, %p103
      %p105 = scmp.ne.s32.totalorder %s97, %s100
      %p106 = scmp.eq.s32.totalorder %s19, 0
      %p107 = por %p105, %p106
      %p108 = scmp.ne.s32.totalorder %s97, %s100
      %p109 = scmp.eq.s32.totalorder %s24, 7
      %p110 = por %p108, %p109
      %p111 = scmp.ne.s32.totalorder %s100, %s101
      %p112 = scmp.eq.s32.totalorder %s24, 0
      %p113 = por %p111, %p112
      %p114 = scmp.ne.s32.totalorder %s100, %s101
      %p115 = scmp.eq.s32.totalorder %s25, 7
      %p116 = por %p114, %p115
      %p118 = scmp.ne.s32.totalorder %s101, %s117
      %p119 = scmp.eq.s32.totalorder %s25, 0
      %p120 = por %p118, %p119
      %s121 = ssub.s32 %s26, %s38
      %p122 = scmp.eq.s32.totalorder %s121, 0
      %s124 = sadd.s32 %s123, 1
      %s125 = scalar_select %p122, %s123, %s124
      %p128 = pneg %p122
      %p129 = scmp.eq.s32.totalorder %s19, 7
      %p130 = por %p128, %p129
      %p131 = scmp.ne.s32.totalorder %s123, %s126
      %p132 = scmp.eq.s32.totalorder %s19, 0
      %p133 = por %p131, %p132
      %p134 = scmp.ne.s32.totalorder %s123, %s126
      %p135 = scmp.eq.s32.totalorder %s24, 7
      %p136 = por %p134, %p135
      %p137 = scmp.ne.s32.totalorder %s126, %s127
      %p138 = scmp.eq.s32.totalorder %s24, 0
      %p139 = por %p137, %p138
      %p140 = scmp.ne.s32.totalorder %s126, %s127
      %p141 = scmp.eq.s32.totalorder %s25, 7
      %p142 = por %p140, %p141
      %p144 = scmp.ne.s32.totalorder %s127, %s143
      %p145 = scmp.eq.s32.totalorder %s25, 0
      %p146 = por %p144, %p145
      %s148 = sadd.s32 %s147, 1
      %p151 = scmp.eq.s32.totalorder %s19, 7
      %p152 = scmp.ne.s32.totalorder %s147, %s149
      %p153 = scmp.eq.s32.totalorder %s19, 0
      %p154 = por %p152, %p153
      %p155 = scmp.ne.s32.totalorder %s147, %s149
      %p156 = scmp.eq.s32.totalorder %s24, 7
      %p157 = por %p155, %p156
      %p158 = scmp.ne.s32.totalorder %s149, %s150
      %p159 = scmp.eq.s32.totalorder %s24, 0
      %p160 = por %p158, %p159
      %p161 = scmp.ne.s32.totalorder %s149, %s150
      %p162 = scmp.eq.s32.totalorder %s25, 7
      %p163 = por %p161, %p162
      %p165 = scmp.ne.s32.totalorder %s150, %s164
      %p166 = scmp.eq.s32.totalorder %s25, 0
      %p167 = por %p165, %p166
      %s169 = sadd.s32 %s168, 1
      %p172 = scmp.eq.s32.totalorder %s19, 7
      %p173 = scmp.ne.s32.totalorder %s168, %s170
      %p174 = scmp.eq.s32.totalorder %s19, 0
      %p175 = por %p173, %p174
      %p176 = scmp.ne.s32.totalorder %s168, %s170
      %p177 = scmp.eq.s32.totalorder %s24, 7
      %p178 = por %p176, %p177
      %p179 = scmp.ne.s32.totalorder %s170, %s171
      %p180 = scmp.eq.s32.totalorder %s24, 0
      %p181 = por %p179, %p180
      %p182 = scmp.ne.s32.totalorder %s170, %s171
      %p183 = scmp.eq.s32.totalorder %s25, 7
      %p184 = por %p182, %p183
      %p186 = scmp.ne.s32.totalorder %s171, %s185
      %p187 = scmp.eq.s32.totalorder %s25, 0
      %p188 = por %p186, %p187
      %s190 = sadd.s32 %s189, 1
      %p193 = scmp.eq.s32.totalorder %s19, 7
      %p194 = scmp.ne.s32.totalorder %s189, %s191
      %p195 = scmp.eq.s32.totalorder %s19, 0
      %p196 = por %p194, %p195
      %p197 = scmp.ne.s32.totalorder %s189, %s191
      %p198 = scmp.eq.s32.totalorder %s24, 7
      %p199 = por %p197, %p198
      %p200 = scmp.ne.s32.totalorder %s191, %s192
      %p201 = scmp.eq.s32.totalorder %s24, 0
      %p202 = por %p200, %p201
      %p203 = scmp.ne.s32.totalorder %s191, %s192
      %p204 = scmp.eq.s32.totalorder %s25, 7
      %p205 = por %p203, %p204
      %p207 = scmp.ne.s32.totalorder %s192, %s206
      %p208 = scmp.eq.s32.totalorder %s25, 0
      %p209 = por %p207, %p208
      %s210 = ssub.s32 %s26, %s38
      %p211 = scmp.eq.s32.totalorder %s210, 0
      %s213 = sadd.s32 %s212, 1
      %s214 = scalar_select %p211, %s212, %s213
      %p217 = pneg %p211
      %p218 = scmp.eq.s32.totalorder %s19, 7
      %p219 = por %p217, %p218
      %p220 = scmp.ne.s32.totalorder %s212, %s215
      %p221 = scmp.eq.s32.totalorder %s19, 0
      %p222 = por %p220, %p221
      %p223 = scmp.ne.s32.totalorder %s212, %s215
      %p224 = scmp.eq.s32.totalorder %s24, 7
      %p225 = por %p223, %p224
      %p226 = scmp.ne.s32.totalorder %s215, %s216
      %p227 = scmp.eq.s32.totalorder %s24, 0
      %p228 = por %p226, %p227
      %p229 = scmp.ne.s32.totalorder %s215, %s216
      %p230 = scmp.eq.s32.totalorder %s25, 7
      %p231 = por %p229, %p230
      %p233 = scmp.ne.s32.totalorder %s216, %s232
      %p234 = scmp.eq.s32.totalorder %s25, 0
      %p235 = por %p233, %p234
      %p236 = scmp.le.s32.totalorder 1, %s19
      %p237 = scmp.lt.s32.totalorder %s19, 9
      %p238 = pnand %p236, %p237
      %p239 = pneg %p238
      // Predicated region
      $region9: #{_run.1} parent=5 // pred_check
        _
      $region10: #{_run.1} parent=5 // pred_check_branch
        %241 = sbr.rel (%p238) target = $region12
      $region11: #{_run.1} parent=5 // pred_region
        %s242 = ssub.s32 %s19, 1
        // Predicated region
        $region13: #{_run.1} parent=11 // pred_check
          %p243 = pneg %p57
        $region14: #{_run.1} parent=11 // pred_check_branch
          %245 = sbr.rel (%p243) target = $region16
        $region15: #{_run.1} parent=11 // pred_region
          %s247 = ssub.s32 1024, 1024
          %248 = vsyncadd [#allocation4], %s247
          %s249 = smul.addr %s28, 8
          %s250 = smul.addr %s249, 128
          %s251 = scalar_lea.hbm %s0, %s250
          %s252 = sshll.u32 [#allocation3], 4
          %s253 = int_to_ptr.vmem [resolvable:$true] %s252
          %258 = dma.hbm_to_vmem [thread:$0]  %s251, 1024, %s253, [#allocation4], 128, 128, 8
        $region16: #{_run.1} parent=11 // pred_fallthru
          _
        // Predicated region
        $region17: #{_run.1} parent=11 // pred_check
          %p259 = pneg %p139
        $region18: #{_run.1} parent=11 // pred_check_branch
          %261 = sbr.rel (%p259) target = $region20
        $region19: #{_run.1} parent=11 // pred_region
          %p262 = scmp.lt.s32.totalorder %s28, 1
          %s263 = scalar_select %p262, %s28, 1
          %s264 = smul.addr %s263, 2
          %s265 = smul.addr %s264, 8
          %s266 = scalar_lea.vmem %s3, %s265
        $region20: #{_run.1} parent=11 // pred_fallthru
          _
        // Predicated region
        $region21: #{_run.1} parent=11 // pred_check
          %p267 = pneg %p160
        $region22: #{_run.1} parent=11 // pred_check_branch
          %269 = sbr.rel (%p267) target = $region24
        $region23: #{_run.1} parent=11 // pred_region
          _
        $region24: #{_run.1} parent=11 // pred_fallthru
          _
        // Predicated region
        $region25: #{_run.1} parent=11 // pred_check
          %p270 = pneg %p181
        $region26: #{_run.1} parent=11 // pred_check_branch
          %272 = sbr.rel (%p270) target = $region28
        $region27: #{_run.1} parent=11 // pred_region
          _
        $region28: #{_run.1} parent=11 // pred_fallthru
          _
        // Predicated region
        $region29: #{_run.1} parent=11 // pred_check
          %p273 = pneg %p202
        $region30: #{_run.1} parent=11 // pred_check_branch
          %275 = sbr.rel (%p273) target = $region32
        $region31: #{_run.1} parent=11 // pred_region
          _
        $region32: #{_run.1} parent=11 // pred_fallthru
          _
      $region12: #{_run.1} parent=5 // pred_fallthru
        _
      %p276 = scmp.lt.s32.totalorder %s19, 8
      // Predicated region
      $region33: #{_run.1} parent=5 // pred_check
        %p277 = pneg %p276
      $region34: #{_run.1} parent=5 // pred_check_branch
        %279 = sbr.rel (%p277) target = $region36
      $region35: #{_run.1} parent=5 // pred_region
        // Predicated region
        $region37: #{_run.1} parent=35 // pred_check
          %p280 = pneg %p79
        $region38: #{_run.1} parent=35 // pred_check_branch
          %282 = sbr.rel (%p280) target = $region40
        $region39: #{_run.1} parent=35 // pred_region
          %s283 = sand.u32 %s19, 1
          %s284 = scalar_lea.sflag [#allocation7], %s283
          %s285 = sand.u32 %s69, 1
          %s286 = smul.addr %s285, 32
          %s287 = scalar_lea.vmem [#allocation6], %s286
          %s289 = ssub.s32 512, 512
          %290 = vsyncadd %s284, %s289
          %s291 = smul.addr %s27, 4
          %s292 = smul.addr %s26, 16
          %s293 = sadd.s32 %s291, %s292
          %s294 = smul.addr %s293, 128
          %s295 = scalar_lea.hbm %s1, %s294
          %s296 = sshll.u32 %s287, 4
          %s297 = int_to_ptr.vmem [resolvable:$true] %s296
          %302 = dma.hbm_to_vmem [thread:$0]  %s295, 512, %s297, %s284, 128, 128, 8
        $region40: #{_run.1} parent=35 // pred_fallthru
          _
        // Predicated region
        $region41: #{_run.1} parent=35 // pred_check
          %p303 = pneg %p107
        $region42: #{_run.1} parent=35 // pred_check_branch
          %305 = sbr.rel (%p303) target = $region44
        $region43: #{_run.1} parent=35 // pred_region
          %s306 = sand.u32 %s19, 1
          %s307 = scalar_lea.sflag [#allocation7], %s306
          %s308 = sand.u32 %s97, 1
          %s309 = smul.addr %s308, 32
          %s310 = scalar_lea.vmem [#allocation8], %s309
          %s312 = ssub.s32 512, 512
          %313 = vsyncadd %s307, %s312
          %s314 = smul.addr %s27, 8
          %s315 = smul.addr %s26, 32
          %s316 = sadd.s32 %s314, %s315
          %s317 = smul.addr %s316, 64
          %s318 = scalar_lea.hbm %s2, %s317
          %s319 = sshll.u32 %s310, 4
          %s320 = int_to_ptr.vmem [resolvable:$true] %s319
          %325 = dma.hbm_to_vmem [thread:$0]  %s318, 512, %s320, %s307, 64, 64, 4
        $region44: #{_run.1} parent=35 // pred_fallthru
          _
      $region36: #{_run.1} parent=5 // pred_fallthru
        _
      %p326 = scmp.le.s32.totalorder 1, %s19
      %p327 = scmp.lt.s32.totalorder %s19, 9
      %p328 = pnand %p326, %p327
      %p329 = pneg %p328
      // Predicated region
      $region45: #{_run.1} parent=5 // pred_check
        _
      $region46: #{_run.1} parent=5 // pred_check_branch
        %331 = sbr.rel (%p328) target = $region48
      $region47: #{_run.1} parent=5 // pred_region
        %s332 = ssub.s32 %s19, 1
        // Predicated region
        $region49: #{_run.1} parent=47 // pred_check
          %p333 = pneg %p57
        $region50: #{_run.1} parent=47 // pred_check_branch
          %335 = sbr.rel (%p333) target = $region52
        $region51: #{_run.1} parent=47 // pred_region
          %336 = dma.done [#allocation4], 1024
        $region52: #{_run.1} parent=47 // pred_fallthru
          _
        %s337 = sand.u32 %s24, 1
        %s338 = scalar_lea.sflag [#allocation7], %s337
        %s339 = sand.u32 %s72, 1
        %s340 = smul.addr %s339, 32
        %s341 = scalar_lea.vmem [#allocation6], %s340
        // Predicated region
        $region53: #{_run.1} parent=47 // pred_check
          %p342 = pneg %p85
        $region54: #{_run.1} parent=47 // pred_check_branch
          %344 = sbr.rel (%p342) target = $region56
        $region55: #{_run.1} parent=47 // pred_region
          %345 = dma.done %s338, 512
        $region56: #{_run.1} parent=47 // pred_fallthru
          _
        %s346 = sand.u32 %s24, 1
        %s347 = scalar_lea.sflag [#allocation7], %s346
        %s348 = sand.u32 %s100, 1
        %s349 = smul.addr %s348, 32
        %s350 = scalar_lea.vmem [#allocation8], %s349
        // Predicated region
        $region57: #{_run.1} parent=47 // pred_check
          %p351 = pneg %p113
        $region58: #{_run.1} parent=47 // pred_check_branch
          %353 = sbr.rel (%p351) target = $region60
        $region59: #{_run.1} parent=47 // pred_region
          %354 = dma.done %s347, 512
        $region60: #{_run.1} parent=47 // pred_fallthru
          _
        %p355 = pneg %p57
        %p356 = pneg %p54
        %s357 = sand.u32 %s24, 1
        %s358 = scalar_lea.sflag [#allocation7], %s357
        %s359 = sand.u32 %s72, 1
        %s360 = smul.addr %s359, 32
        %s361 = scalar_lea.vmem [#allocation6], %s360
        %p362 = pneg %p85
        %p363 = pneg %p82
        %s364 = sand.u32 %s24, 1
        %s365 = scalar_lea.sflag [#allocation7], %s364
        %s366 = sand.u32 %s100, 1
        %s367 = smul.addr %s366, 32
        %s368 = scalar_lea.vmem [#allocation8], %s367
        %p369 = pneg %p113
        %p370 = pneg %p110
        %p371 = scmp.lt.s32.totalorder %s28, 1
        %s372 = scalar_select %p371, %s28, 1
        %s373 = smul.addr %s372, 2
        %s374 = smul.addr %s373, 8
        %s375 = scalar_lea.vmem %s3, %s374
        %p376 = pneg %p139
        %p377 = pneg %p136
        %p378 = pneg %p160
        %p379 = pneg %p157
        %p380 = pneg %p181
        %p381 = pneg %p178
        %p382 = pneg %p202
        %p383 = pneg %p199
        %p384 = pneg %p228
        %p385 = pneg %p225
        %p386 = scmp.lt.s32.totalorder %s28, 1
        %s387 = scalar_select %p386, %s28, 1
        %s388 = smul.addr %s387, 2
        %s389 = smul.addr %s388, 8
        %s390 = scalar_lea.vmem %s3, %s389
        %p392 = scmp.eq.s32.totalorder %s29, 0
        // Predicated region
        $region61: #{_run.1} parent=47 // pred_check
          %p393 = pneg %p392
        $region62: #{_run.1} parent=47 // pred_check_branch
          %395 = sbr.rel (%p393) target = $region64
        $region63: #{_run.1} parent=47 // pred_region
          %vm396 = vcmask 130048
          %397 = vst.msk [vmem:[#allocation9] sm:$0xff] %vm396, 0.0
          %398 = vst.msk [vmem:[#allocation9 + $0x8] sm:$0xff] %vm396, 0.0
          %399 = vst.msk [vmem:[#allocation9 + $0x10] sm:$0xff] %vm396, 0.0
          %400 = vst.msk [vmem:[#allocation9 + $0x18] sm:$0xff] %vm396, 0.0
          %401 = vst.msk [vmem:[#allocation9 + $0x20] sm:$0xff] %vm396, 0.0
          %402 = vst.msk [vmem:[#allocation9 + $0x28] sm:$0xff] %vm396, 0.0
          %403 = vst.msk [vmem:[#allocation9 + $0x30] sm:$0xff] %vm396, 0.0
          %404 = vst.msk [vmem:[#allocation9 + $0x38] sm:$0xff] %vm396, 0.0
        $region64: #{_run.1} parent=47 // pred_fallthru
          _
        %v405 = vld [vmem:[%s390] sm:$0xff]
        %v406 = vld [vmem:[%s390 + $0x8] sm:$0xff]
        %v407 = vld [vmem:[%s4] sm:$0xf]
        %v408 = vld [vmem:[%s4 + $0x4] sm:$0xf]
        %v409 = vld [vmem:[%s4 + $0x8] sm:$0xf]
        %v410 = vld [vmem:[%s4 + $0xc] sm:$0xf]
        %v411 = vld [vmem:[%s5] sm:$0xf]
        %v412 = vld [vmem:[%s5 + $0x4] sm:$0xf]
        %v413 = vld [vmem:[#allocation3] sm:$0xff]
        %v414 = vld [vmem:[#allocation3 + $0x8] sm:$0xff]
        %v415 = vld [vmem:[#allocation3 + $0x10] sm:$0xff]
        %v416 = vld [vmem:[#allocation3 + $0x18] sm:$0xff]
        %s417 = scalar_lea.vmem [#allocation3], 32
        %v418 = vld [vmem:[%s417] sm:$0xff]
        %v419 = vld [vmem:[%s417 + $0x8] sm:$0xff]
        %v420 = vld [vmem:[%s417 + $0x10] sm:$0xff]
        %v421 = vld [vmem:[%s417 + $0x18] sm:$0xff]
        %v422 = vld [vmem:[%s350] sm:$0xf]
        %v423 = vld [vmem:[%s350 + $0x4] sm:$0xf]
        %v424 = vld [vmem:[%s350 + $0x8] sm:$0xf]
        %v425 = vld [vmem:[%s350 + $0xc] sm:$0xf]
        %s426 = scalar_lea.vmem %s350, 16 [#allocation8]
        %v427 = vld [vmem:[%s426] sm:$0xf]
        %v428 = vld [vmem:[%s426 + $0x4] sm:$0xf]
        %v429 = vld [vmem:[%s426 + $0x8] sm:$0xf]
        %v430 = vld [vmem:[%s426 + $0xc] sm:$0xf]
        %v431 = vld [vmem:[%s341] sm:$0xff]
        %v432 = vld [vmem:[%s341 + $0x8] sm:$0xff]
        %s433 = scalar_lea.vmem %s341, 16 [#allocation6]
        %v434 = vld [vmem:[%s433] sm:$0xff]
        %v435 = vld [vmem:[%s433 + $0x8] sm:$0xff]
        %v436 = vunpack.c.l.bf16 %v422
        %v437 = vunpack.c.l.bf16 %v423
        %v438 = vunpack.c.l.bf16 %v424
        %v439 = vunpack.c.l.bf16 %v425
        %v440 = vmul.f32 %v413, %v436
        %v441 = vmul.f32 %v414, %v437
        %v442 = vmul.f32 %v415, %v438
        %v443 = vmul.f32 %v416, %v439
        %v444 = vunpack.c.l.bf16 %v427
        %v445 = vunpack.c.l.bf16 %v428
        %v446 = vunpack.c.l.bf16 %v429
        %v447 = vunpack.c.l.bf16 %v430
        %v448 = vmul.f32 %v418, %v444
        %v449 = vmul.f32 %v419, %v445
        %v450 = vmul.f32 %v420, %v446
        %v451 = vmul.f32 %v421, %v447
        %v452 = vsub.f32 %v440, %v448
        %v453 = vsub.f32 %v441, %v449
        %v454 = vsub.f32 %v442, %v450
        %v455 = vsub.f32 %v443, %v451
        %vm456 = vcmask 130048
        %v457 = vsel %vm456, %v452, 0.0
        %v458 = vsel %vm456, %v454, 0.0
        %v459 = vadd.f32 %v457, %v458
        %v460 = vsel %vm456, %v453, 0.0
        %v461 = vsel %vm456, %v455, 0.0
        %v462 = vadd.f32 %v460, %v461
        %v463 = vmul.f32 %v413, %v444
        %v464 = vmul.f32 %v414, %v445
        %v465 = vmul.f32 %v415, %v446
        %v466 = vmul.f32 %v416, %v447
        %v467 = vmul.f32 %v418, %v436
        %v468 = vmul.f32 %v419, %v437
        %v469 = vmul.f32 %v420, %v438
        %v470 = vmul.f32 %v421, %v439
        %v471 = vadd.f32 %v463, %v467
        %v472 = vadd.f32 %v464, %v468
        %v473 = vadd.f32 %v465, %v469
        %v474 = vadd.f32 %v466, %v470
        %v475 = vsel %vm456, %v471, 0.0
        %v476 = vsel %vm456, %v473, 0.0
        %v477 = vadd.f32 %v475, %v476
        %v478 = vsel %vm456, %v472, 0.0
        %v479 = vsel %vm456, %v474, 0.0
        %v480 = vadd.f32 %v478, %v479
        %483 = vrot.lane.b32.xlu0 %v477, 16
        %v484 = vpop.permute.xlu0 %483
        %485 = vrot.lane.b32.xlu0 %v480, 16
        %v486 = vpop.permute.xlu0 %485
        %v489 = vsel %vm456, %v459, %v484
        %v490 = vsel %vm456, %v462, %v486
        %v491 = vpack.c.bf16 %v490, %v489
        %v496 = vunpack.c.l.b16 %v407
        %v497 = vunpack.c.l.b16 %v408
        %v498 = vunpack.c.l.b16 %v409
        %v499 = vunpack.c.l.b16 %v410
        %v500 = vpack.c.b16 %v497, %v496
        %v501 = vpack.c.b16 %v499, %v498
        %v503 = vsel %vm456, %v500, 0
        %v506 = vsel %vm456, %v501, 0
        %508 = vmatprep.subr.bf16.mxu0 0
        %509 = vmatpush1.bf16.msra.mxu0 %v491
        %510 = vmatprep.subr.bf16.mxu0 0
        %511 = vmatpush1.bf16.msra.mxu0 0
        %512 = vmatprep.subr.bf16.mxu0 0
        %513 = vmatpush1.bf16.msra.mxu0 0
        %514 = vmatprep.subr.bf16.mxu0 0
        %515 = vmatpush1.bf16.msra.mxu0 0
        %516 = vmatprep.subr.bf16.mxu0 0
        %517 = vmatpush1.bf16.msra.mxu0 0
        %518 = vmatprep.subr.bf16.mxu0 0
        %519 = vmatpush1.bf16.msra.mxu0 0
        %520 = vmatprep.subr.bf16.mxu0 0
        %521 = vmatpush1.bf16.msra.mxu0 0
        %522 = vmatprep.subr.bf16.mxu0 0
        %523 = vmatpush1.bf16.msra.mxu0 0
        %524 = vmatprep.subr.bf16.mxu0 0
        %525 = vmatpush1.bf16.msra.mxu0 0
        %526 = vmatprep.subr.bf16.mxu0 0
        %527 = vmatpush1.bf16.msra.mxu0 0
        %528 = vmatprep.subr.bf16.mxu0 0
        %529 = vmatpush1.bf16.msra.mxu0 0
        %530 = vmatprep.subr.bf16.mxu0 0
        %531 = vmatpush1.bf16.msra.mxu0 0
        %532 = vmatprep.subr.bf16.mxu0 0
        %533 = vmatpush1.bf16.msra.mxu0 0
        %534 = vmatprep.subr.bf16.mxu0 0
        %535 = vmatpush1.bf16.msra.mxu0 0
        %536 = vmatprep.subr.bf16.mxu0 0
        %537 = vmatpush1.bf16.msra.mxu0 0
        %538 = vmatprep.subr.bf16.mxu0 0
        %539 = vmatpush1.bf16.msra.mxu0 0
        %540 = vmatprep.mubr.bf16.mxu0 0
        %541 = vmatmul.mubr.bf16.gmra.mrb[0].mxu0 %v503
        %v542 = vpop.f32.mrb[0].mxu0
        %v543 = vadd.f32 0.0, %v542
        %v544 = vpop.f32.mrb[0].mxu0
        %v545 = vpop.f32.mrb[0].mxu0
        %v546 = vadd.f32 0.0, %v545
        %v547 = vpop.f32.mrb[0].mxu0
        %548 = vmatprep.mubr.bf16.mxu0 0
        %549 = vmatmul.mubr.bf16.gmra.mrb[0].mxu0 %v506
        %v550 = vpop.f32.mrb[0].mxu0
        %v551 = vadd.f32 0.0, %v550
        %v552 = vpop.f32.mrb[0].mxu0
        %v553 = vpop.f32.mrb[0].mxu0
        %v554 = vadd.f32 0.0, %v553
        %v555 = vpop.f32.mrb[0].mxu0
        %556 = vdwg.mxu0
        %559 = vrot.lane.b32.xlu0 %v551, 112
        %v560 = vpop.permute.xlu0 %559
        %561 = vrot.lane.b32.xlu0 %v554, 112
        %v562 = vpop.permute.xlu0 %561
        %v565 = vsub.f32 %v543, %v560
        %v566 = vsub.f32 %v546, %v562
        %567 = vrot.lane.b32.xlu0 %v551, 16
        %v568 = vpop.permute.xlu0 %567
        %569 = vrot.lane.b32.xlu0 %v554, 16
        %v570 = vpop.permute.xlu0 %569
        %v573 = vadd.f32 %v543, %v568
        %v574 = vadd.f32 %v546, %v570
        %577 = vrot.lane.b32.xlu0 %v573, 112
        %v578 = vpop.permute.xlu0 %577
        %579 = vrot.lane.b32.xlu0 %v574, 112
        %v580 = vpop.permute.xlu0 %579
        %v583 = vpack.c.bf16 %v566, %v565
        %v584 = vpack.c.bf16 %v580, %v578
        %v587 = vunpack.c.l.b16 %v411
        %v588 = vunpack.c.l.b16 %v412
        %v589 = vpack.c.b16 %v588, %v587
        %v592 = vsel %vm456, %v583, 0
        %v595 = vsel %vm456, %v584, 0
        %597 = vmatprep.subr.bf16.mxu0 0
        %598 = vmatpush1.bf16.msra.mxu0 %v589
        %599 = vmatprep.subr.bf16.mxu0 0
        %600 = vmatpush1.bf16.msra.mxu0 0
        %601 = vmatprep.subr.bf16.mxu0 0
        %602 = vmatpush1.bf16.msra.mxu0 0
        %603 = vmatprep.subr.bf16.mxu0 0
        %604 = vmatpush1.bf16.msra.mxu0 0
        %605 = vmatprep.subr.bf16.mxu0 0
        %606 = vmatpush1.bf16.msra.mxu0 0
        %607 = vmatprep.subr.bf16.mxu0 0
        %608 = vmatpush1.bf16.msra.mxu0 0
        %609 = vmatprep.subr.bf16.mxu0 0
        %610 = vmatpush1.bf16.msra.mxu0 0
        %611 = vmatprep.subr.bf16.mxu0 0
        %612 = vmatpush1.bf16.msra.mxu0 0
        %613 = vmatprep.subr.bf16.mxu0 0
        %614 = vmatpush1.bf16.msra.mxu0 0
        %615 = vmatprep.subr.bf16.mxu0 0
        %616 = vmatpush1.bf16.msra.mxu0 0
        %617 = vmatprep.subr.bf16.mxu0 0
        %618 = vmatpush1.bf16.msra.mxu0 0
        %619 = vmatprep.subr.bf16.mxu0 0
        %620 = vmatpush1.bf16.msra.mxu0 0
        %621 = vmatprep.subr.bf16.mxu0 0
        %622 = vmatpush1.bf16.msra.mxu0 0
        %623 = vmatprep.subr.bf16.mxu0 0
        %624 = vmatpush1.bf16.msra.mxu0 0
        %625 = vmatprep.subr.bf16.mxu0 0
        %626 = vmatpush1.bf16.msra.mxu0 0
        %627 = vmatprep.subr.bf16.mxu0 0
        %628 = vmatpush1.bf16.msra.mxu0 0
        %629 = vmatprep.mubr.bf16.mxu0 0
        %630 = vmatmul.mubr.bf16.gmra.mrb[0].mxu0 %v592
        %v631 = vpop.f32.mrb[0].mxu0
        %v632 = vadd.f32 0.0, %v631
        %v633 = vpop.f32.mrb[0].mxu0
        %v634 = vpop.f32.mrb[0].mxu0
        %v635 = vadd.f32 0.0, %v634
        %v636 = vpop.f32.mrb[0].mxu0
        %637 = vmatprep.mubr.bf16.mxu0 0
        %638 = vmatmul.mubr.bf16.gmra.mrb[0].mxu0 %v595
        %v639 = vpop.f32.mrb[0].mxu0
        %v640 = vadd.f32 0.0, %v639
        %v641 = vpop.f32.mrb[0].mxu0
        %v642 = vpop.f32.mrb[0].mxu0
        %v643 = vadd.f32 0.0, %v642
        %v644 = vpop.f32.mrb[0].mxu0
        %645 = vdwg.mxu0
        %648 = vrot.lane.b32.xlu0 %v640, 112
        %v649 = vpop.permute.xlu0 %648
        %650 = vrot.lane.b32.xlu0 %v643, 112
        %v651 = vpop.permute.xlu0 %650
        %v654 = vsub.f32 %v632, %v649
        %v655 = vsub.f32 %v635, %v651
        %656 = vrot.lane.b32.xlu0 %v640, 16
        %v657 = vpop.permute.xlu0 %656
        %658 = vrot.lane.b32.xlu0 %v643, 16
        %v659 = vpop.permute.xlu0 %658
        %v662 = vadd.f32 %v632, %v657
        %v663 = vadd.f32 %v635, %v659
        %v664 = vmul.f32 %v654, %v405
        %v665 = vmul.f32 %v655, %v406
        %v666 = vsub.f32 %v664, %v431
        %v667 = vsub.f32 %v665, %v432
        %670 = vrot.lane.b32.xlu0 %v405, 16
        %v671 = vpop.permute.xlu0 %670
        %672 = vrot.lane.b32.xlu0 %v406, 16
        %v673 = vpop.permute.xlu0 %672
        %v676 = vmul.f32 %v662, %v671
        %v677 = vmul.f32 %v663, %v673
        %680 = vrot.lane.b32.xlu0 %v434, 16
        %v681 = vpop.permute.xlu0 %680
        %682 = vrot.lane.b32.xlu0 %v435, 16
        %v683 = vpop.permute.xlu0 %682
        %v686 = vsub.f32 %v676, %v681
        %v687 = vsub.f32 %v677, %v683
        %v688 = vmul.f32 %v666, %v405
        %v689 = vmul.f32 %v667, %v406
        %v690 = vmul.f32 %v686, %v671
        %v691 = vmul.f32 %v687, %v673
        %v692 = vsel %vm456, %v688, %v690
        %v693 = vsel %vm456, %v689, %v691
        %v694 = vpack.c.bf16 %v693, %v692
        %695 = vmatprep.subr.bf16.mxu0 0
        %696 = vmatpush1.bf16.msra.mxu0 %v694
        %697 = vmatprep.subr.bf16.mxu0 0
        %698 = vmatpush1.bf16.msra.mxu0 0
        %699 = vmatprep.subr.bf16.mxu0 0
        %700 = vmatpush1.bf16.msra.mxu0 0
        %701 = vmatprep.subr.bf16.mxu0 0
        %702 = vmatpush1.bf16.msra.mxu0 0
        %703 = vmatprep.subr.bf16.mxu0 0
        %704 = vmatpush1.bf16.msra.mxu0 0
        %705 = vmatprep.subr.bf16.mxu0 0
        %706 = vmatpush1.bf16.msra.mxu0 0
        %707 = vmatprep.subr.bf16.mxu0 0
        %708 = vmatpush1.bf16.msra.mxu0 0
        %709 = vmatprep.subr.bf16.mxu0 0
        %710 = vmatpush1.bf16.msra.mxu0 0
        %711 = vmatprep.subr.bf16.mxu0 0
        %712 = vmatpush1.bf16.msra.mxu0 0
        %713 = vmatprep.subr.bf16.mxu0 0
        %714 = vmatpush1.bf16.msra.mxu0 0
        %715 = vmatprep.subr.bf16.mxu0 0
        %716 = vmatpush1.bf16.msra.mxu0 0
        %717 = vmatprep.subr.bf16.mxu0 0
        %718 = vmatpush1.bf16.msra.mxu0 0
        %719 = vmatprep.subr.bf16.mxu0 0
        %720 = vmatpush1.bf16.msra.mxu0 0
        %721 = vmatprep.subr.bf16.mxu0 0
        %722 = vmatpush1.bf16.msra.mxu0 0
        %723 = vmatprep.subr.bf16.mxu0 0
        %724 = vmatpush1.bf16.msra.mxu0 0
        %725 = vmatprep.subr.bf16.mxu0 0
        %726 = vmatpush1.bf16.msra.mxu0 0
        %727 = vmatprep.mubr.bf16.mxu0 0
        %728 = vmatmul.mubr.bf16.gmra.mrb[0].mxu0 %v503
        %v729 = vpop.f32.mrb[0].mxu0
        %v730 = vadd.f32 0.0, %v729
        %v731 = vpop.f32.mrb[0].mxu0
        %v732 = vpop.f32.mrb[0].mxu0
        %v733 = vadd.f32 0.0, %v732
        %v734 = vpop.f32.mrb[0].mxu0
        %735 = vmatprep.mubr.bf16.mxu0 0
        %736 = vmatmul.mubr.bf16.gmra.mrb[0].mxu0 %v506
        %v737 = vpop.f32.mrb[0].mxu0
        %v738 = vadd.f32 0.0, %v737
        %v739 = vpop.f32.mrb[0].mxu0
        %v740 = vpop.f32.mrb[0].mxu0
        %v741 = vadd.f32 0.0, %v740
        %v742 = vpop.f32.mrb[0].mxu0
        %743 = vdwg.mxu0
        %746 = vrot.lane.b32.xlu0 %v738, 112
        %v747 = vpop.permute.xlu0 %746
        %748 = vrot.lane.b32.xlu0 %v741, 112
        %v749 = vpop.permute.xlu0 %748
        %v752 = vadd.f32 %v730, %v747
        %v753 = vadd.f32 %v733, %v749
        %754 = vrot.lane.b32.xlu0 %v738, 16
        %v755 = vpop.permute.xlu0 %754
        %756 = vrot.lane.b32.xlu0 %v741, 16
        %v757 = vpop.permute.xlu0 %756
        %v760 = vsub.f32 %v730, %v755
        %v761 = vsub.f32 %v733, %v757
        %764 = vrot.lane.b32.xlu0 %v760, 112
        %v765 = vpop.permute.xlu0 %764
        %766 = vrot.lane.b32.xlu0 %v761, 112
        %v767 = vpop.permute.xlu0 %766
        %v770 = vpack.c.bf16 %v753, %v752
        %v771 = vpack.c.bf16 %v767, %v765
        %v773 = vsel %vm456, %v770, 0
        %v776 = vsel %vm456, %v771, 0
        %778 = vmatprep.subr.bf16.mxu0 0
        %779 = vmatpush1.bf16.msra.mxu0 %v589
        %780 = vmatprep.subr.bf16.mxu0 0
        %781 = vmatpush1.bf16.msra.mxu0 0
        %782 = vmatprep.subr.bf16.mxu0 0
        %783 = vmatpush1.bf16.msra.mxu0 0
        %784 = vmatprep.subr.bf16.mxu0 0
        %785 = vmatpush1.bf16.msra.mxu0 0
        %786 = vmatprep.subr.bf16.mxu0 0
        %787 = vmatpush1.bf16.msra.mxu0 0
        %788 = vmatprep.subr.bf16.mxu0 0
        %789 = vmatpush1.bf16.msra.mxu0 0
        %790 = vmatprep.subr.bf16.mxu0 0
        %791 = vmatpush1.bf16.msra.mxu0 0
        %792 = vmatprep.subr.bf16.mxu0 0
        %793 = vmatpush1.bf16.msra.mxu0 0
        %794 = vmatprep.subr.bf16.mxu0 0
        %795 = vmatpush1.bf16.msra.mxu0 0
        %796 = vmatprep.subr.bf16.mxu0 0
        %797 = vmatpush1.bf16.msra.mxu0 0
        %798 = vmatprep.subr.bf16.mxu0 0
        %799 = vmatpush1.bf16.msra.mxu0 0
        %800 = vmatprep.subr.bf16.mxu0 0
        %801 = vmatpush1.bf16.msra.mxu0 0
        %802 = vmatprep.subr.bf16.mxu0 0
        %803 = vmatpush1.bf16.msra.mxu0 0
        %804 = vmatprep.subr.bf16.mxu0 0
        %805 = vmatpush1.bf16.msra.mxu0 0
        %806 = vmatprep.subr.bf16.mxu0 0
        %807 = vmatpush1.bf16.msra.mxu0 0
        %808 = vmatprep.subr.bf16.mxu0 0
        %809 = vmatpush1.bf16.msra.mxu0 0
        %810 = vmatprep.mubr.bf16.mxu0 0
        %811 = vmatmul.mubr.bf16.gmra.mrb[0].mxu0 %v773
        %v812 = vpop.f32.mrb[0].mxu0
        %v813 = vadd.f32 0.0, %v812
        %v814 = vpop.f32.mrb[0].mxu0
        %v815 = vpop.f32.mrb[0].mxu0
        %v816 = vadd.f32 0.0, %v815
        %v817 = vpop.f32.mrb[0].mxu0
        %818 = vmatprep.mubr.bf16.mxu0 0
        %819 = vmatmul.mubr.bf16.gmra.mrb[0].mxu0 %v776
        %v820 = vpop.f32.mrb[0].mxu0
        %v821 = vadd.f32 0.0, %v820
        %v822 = vpop.f32.mrb[0].mxu0
        %v823 = vpop.f32.mrb[0].mxu0
        %v824 = vadd.f32 0.0, %v823
        %v825 = vpop.f32.mrb[0].mxu0
        %826 = vdwg.mxu0
        %829 = vrot.lane.b32.xlu0 %v821, 112
        %v830 = vpop.permute.xlu0 %829
        %831 = vrot.lane.b32.xlu0 %v824, 112
        %v832 = vpop.permute.xlu0 %831
        %v835 = vadd.f32 %v813, %v830
        %v836 = vadd.f32 %v816, %v832
        %839 = vrot.lane.b32.xlu0 %v813, 112
        %v840 = vpop.permute.xlu0 %839
        %841 = vrot.lane.b32.xlu0 %v816, 112
        %v842 = vpop.permute.xlu0 %841
        %v845 = vsub.f32 %v821, %v840
        %v846 = vsub.f32 %v824, %v842
        %v847 = vld [vmem:[#allocation9] sm:$0xff]
        %v848 = vld [vmem:[#allocation9 + $0x8] sm:$0xff]
        %v849 = vld [vmem:[#allocation9 + $0x10] sm:$0xff]
        %v850 = vld [vmem:[#allocation9 + $0x18] sm:$0xff]
        %v851 = vmul.f32 %v835, %v436
        %v852 = vmul.f32 %v836, %v437
        %v853 = vmul.f32 %v835, %v438
        %v854 = vmul.f32 %v836, %v439
        %v855 = vmul.f32 %v845, %v444
        %v856 = vmul.f32 %v846, %v445
        %v857 = vmul.f32 %v845, %v446
        %v858 = vmul.f32 %v846, %v447
        %v859 = vadd.f32 %v851, %v855
        %v860 = vadd.f32 %v852, %v856
        %v861 = vadd.f32 %v853, %v857
        %v862 = vadd.f32 %v854, %v858
        %v863 = vadd.f32 %v847, %v859
        %v864 = vadd.f32 %v848, %v860
        %v865 = vadd.f32 %v849, %v861
        %v866 = vadd.f32 %v850, %v862
        %867 = vst.msk [vmem:[#allocation9] sm:$0xff] %vm456, %v863
        %868 = vst.msk [vmem:[#allocation9 + $0x8] sm:$0xff] %vm456, %v864
        %869 = vst.msk [vmem:[#allocation9 + $0x10] sm:$0xff] %vm456, %v865
        %870 = vst.msk [vmem:[#allocation9 + $0x18] sm:$0xff] %vm456, %v866
        %s871 = scalar_lea.vmem [#allocation9], 32
        %v872 = vld [vmem:[%s871] sm:$0xff]
        %v873 = vld [vmem:[%s871 + $0x8] sm:$0xff]
        %v874 = vld [vmem:[%s871 + $0x10] sm:$0xff]
        %v875 = vld [vmem:[%s871 + $0x18] sm:$0xff]
        %v876 = vmul.f32 %v845, %v436
        %v877 = vmul.f32 %v846, %v437
        %v878 = vmul.f32 %v845, %v438
        %v879 = vmul.f32 %v846, %v439
        %v880 = vmul.f32 %v835, %v444
        %v881 = vmul.f32 %v836, %v445
        %v882 = vmul.f32 %v835, %v446
        %v883 = vmul.f32 %v836, %v447
        %v884 = vsub.f32 %v876, %v880
        %v885 = vsub.f32 %v877, %v881
        %v886 = vsub.f32 %v878, %v882
        %v887 = vsub.f32 %v879, %v883
        %v888 = vadd.f32 %v872, %v884
        %v889 = vadd.f32 %v873, %v885
        %v890 = vadd.f32 %v874, %v886
        %v891 = vadd.f32 %v875, %v887
        %892 = vst.msk [vmem:[%s871] sm:$0xff] %vm456, %v888
        %893 = vst.msk [vmem:[%s871 + $0x8] sm:$0xff] %vm456, %v889
        %894 = vst.msk [vmem:[%s871 + $0x10] sm:$0xff] %vm456, %v890
        %895 = vst.msk [vmem:[%s871 + $0x18] sm:$0xff] %vm456, %v891
        %p896 = scmp.eq.s32.totalorder %s29, 3
        // Predicated region
        $region65: #{_run.1} parent=47 // pred_check
          %p897 = pneg %p896
        $region66: #{_run.1} parent=47 // pred_check_branch
          %899 = sbr.rel (%p897) target = $region68
        $region67: #{_run.1} parent=47 // pred_region
          %s900 = sld [smem:[#allocation2]]
          %v901 = vld [vmem:[#allocation9] sm:$0xff]
          %v902 = vld [vmem:[#allocation9 + $0x8] sm:$0xff]
          %v903 = vld [vmem:[#allocation9 + $0x10] sm:$0xff]
          %v904 = vld [vmem:[#allocation9 + $0x18] sm:$0xff]
          %v905 = vstv %s900
          %v906 = vmul.f32 %v905, %v901
          %v907 = vmul.f32 %v905, %v902
          %v908 = vmul.f32 %v905, %v903
          %v909 = vmul.f32 %v905, %v904
          %v910 = vsub.f32 %v413, %v906
          %v911 = vsub.f32 %v414, %v907
          %v912 = vsub.f32 %v415, %v908
          %v913 = vsub.f32 %v416, %v909
          %914 = vst.msk [vmem:[#allocation9] sm:$0xff] %vm456, %v910
          %915 = vst.msk [vmem:[#allocation9 + $0x8] sm:$0xff] %vm456, %v911
          %916 = vst.msk [vmem:[#allocation9 + $0x10] sm:$0xff] %vm456, %v912
          %917 = vst.msk [vmem:[#allocation9 + $0x18] sm:$0xff] %vm456, %v913
          %v918 = vld [vmem:[%s871] sm:$0xff]
          %v919 = vld [vmem:[%s871 + $0x8] sm:$0xff]
          %v920 = vld [vmem:[%s871 + $0x10] sm:$0xff]
          %v921 = vld [vmem:[%s871 + $0x18] sm:$0xff]
          %v922 = vmul.f32 %v905, %v918
          %v923 = vmul.f32 %v905, %v919
          %v924 = vmul.f32 %v905, %v920
          %v925 = vmul.f32 %v905, %v921
          %v926 = vsub.f32 %v418, %v922
          %v927 = vsub.f32 %v419, %v923
          %v928 = vsub.f32 %v420, %v924
          %v929 = vsub.f32 %v421, %v925
          %930 = vst.msk [vmem:[%s871] sm:$0xff] %vm456, %v926
          %931 = vst.msk [vmem:[%s871 + $0x8] sm:$0xff] %vm456, %v927
          %932 = vst.msk [vmem:[%s871 + $0x10] sm:$0xff] %vm456, %v928
          %933 = vst.msk [vmem:[%s871 + $0x18] sm:$0xff] %vm456, %v929
        $region68: #{_run.1} parent=47 // pred_fallthru
          _
        // Predicated region
        $region69: #{_run.1} parent=47 // pred_check
          %p934 = pneg %p225
        $region70: #{_run.1} parent=47 // pred_check_branch
          %936 = sbr.rel (%p934) target = $region72
        $region71: #{_run.1} parent=47 // pred_region
          %s938 = ssub.s32 1024, 1024
          %939 = vsyncadd [#allocation5], %s938
          %s940 = smul.addr %s28, 8
          %s941 = smul.addr %s940, 128
          %s942 = scalar_lea.hbm %s7, %s941
          %s943 = sshll.u32 [#allocation9], 4
          %s944 = int_to_ptr.vmem [resolvable:$true] %s943
          %949 = dma.vmem_to_hbm [thread:$0]  %s944, 1024, %s942, [#allocation5], 128, 128, 8
        $region72: #{_run.1} parent=47 // pred_fallthru
          _
        // Predicated region
        $region73: #{_run.1} parent=47 // pred_check
          %p950 = pneg %p225
        $region74: #{_run.1} parent=47 // pred_check_branch
          %952 = sbr.rel (%p950) target = $region76
        $region75: #{_run.1} parent=47 // pred_region
          %953 = dma.done [#allocation5], 1024
        $region76: #{_run.1} parent=47 // pred_fallthru
          _
      $region48: #{_run.1} parent=5 // pred_fallthru
        _
      %p954 = scmp.le.s32.totalorder 2, %s19
      // Predicated region
      $region77: #{_run.1} parent=5 // pred_check
        %p955 = pneg %p954
      $region78: #{_run.1} parent=5 // pred_check_branch
        %957 = sbr.rel (%p955) target = $region80
      $region79: #{_run.1} parent=5 // pred_region
        %s958 = ssub.s32 %s19, 2
      $region80: #{_run.1} parent=5 // pred_fallthru
        _
    $region6: #{_run.1} parent=1 // loop_footer
      %s23 = sadd.s32 1, %s19
    $region7: #{_run.1} parent=1 // loop_footer_branch
      %18 = sbr.rel target = $region3
    $region8: #{_run.1} parent=1 // loop_exit
      _
    %959 = vsyncpa [#allocation4], 1
    %s960 = scalar_lea.sflag [#allocation4], 1
    %961 = vsyncpa %s960, 1
    %962 = vsyncpa [#allocation7], 1
    %s963 = scalar_lea.sflag [#allocation7], 1
    %964 = vsyncpa %s963, 1
    %965 = vsyncpa [#allocation5], 1
    %s966 = scalar_lea.sflag [#allocation5], 1
    %967 = vsyncpa %s966, 1

// kernel: _run.1
$region0: #{_run.1}
  #allocation0 [shape = 'u32[]', space=smem, size = 0x4, offset = 0x4, fixed_abs, tag = 'smem constant byte address 0x4 - core index']
  #allocation1 [shape = 'u32[144,128]{1,0:T(1,128)}', space=vmem, size = 0x12000, scoped, tag = 'internal scratch']
  #allocation2 [shape = 'f32[1,1]{1,0:T(1,128)S(6)}', space=smem, size = 0x200, scoped, tag = 'scoped memory for _run.1']
  %s0 = inlined_call_operand.hbm [shape: f32[2,2,2,16,16], index: 0, kind: input, shape index: {}]
  %s1 = inlined_call_operand.hbm [shape: f32[2,4,2,16,16], index: 1, kind: input, shape index: {}]
  %s2 = inlined_call_operand.hbm [shape: bf16[2,4,2,2,16,16], index: 2, kind: input, shape index: {}]
  %s3 = inlined_call_operand.vmem [shape: f32[2,16,16], index: 3, kind: input, shape index: {}]
  %s4 = inlined_call_operand.vmem [shape: bf16[32,16], index: 4, kind: input, shape index: {}]
  %s5 = inlined_call_operand.vmem [shape: bf16[16,32], index: 5, kind: input, shape index: {}]
  %s6 = inlined_call_operand.<no memory space> [shape: f32[1,1], index: 6, kind: input, shape index: {}]
  %s7 = inlined_call_operand.hbm [shape: f32[2,2,2,16,16], index: 7, kind: output, shape index: {}]
  %s8 = sld [smem:[#allocation0]]
  $region81: #{_run.1} parent=0
    _
  %s10 = ssub.s32 1, %s8
  %s11 = scalar_select 0, %s10, %s8
  %12 = sst [smem:[#allocation2]] %s6
  $region1: #{_run.1} parent=0
    #allocation3 [shape = 'u8[65536]{0}', space=vmem, size = 0x10000, scoped, tag = 'input window, operand 0']
    #allocation4 [shape = 's32[2]{0}', space=sflag, size = 0x8, scoped, tag = 'scoped memory for _run.1']
    #allocation5 [shape = 's32[2]{0}', space=sflag, size = 0x8, scoped, tag = 'scoped memory for _run.1']
    #allocation6 [shape = 'u8[32768]{0}', space=vmem, size = 0x8000, scoped, tag = 'input window, operand 1']
    #allocation7 [shape = 's32[2]{0}', space=sflag, size = 0x8, scoped, tag = 'scoped memory for _run.1']
    #allocation8 [shape = 'u8[32768]{0}', space=vmem, size = 0x8000, scoped, tag = 'input window, operand 2']
    #allocation9 [shape = 'u8[65536]{0}', space=vmem, size = 0x10000, scoped, tag = 'output window, operand 0']
    %13 = vsyncpa [#allocation4], 0
    %s14 = scalar_lea.sflag [#allocation4], 1
    %15 = vsyncpa %s14, 0
    %16 = vsyncpa [#allocation7], 0
    %s17 = scalar_lea.sflag [#allocation7], 1
    %18 = vsyncpa %s17, 0
    %19 = vsyncpa [#allocation5], 0
    %s20 = scalar_lea.sflag [#allocation5], 1
    %21 = vsyncpa %s20, 0
    loop: start=0, step=1, limit=10
    $region2: #{_run.1} parent=1 // loop_pre_header
      _
    $region3: #{_run.1} parent=1 // loop_header
      %s23 = sphi 0, %s27
      %p24 = scmp.ge.s32.totalorder %s23, 10
      %s30 = sphi 0, %s42
      %s31 = sphi 0, %s38
      %s32 = sphi 0, %s30
      %s33 = sphi 0, %s31
      %s34 = sphi 0, %s32
      %s35 = sphi 0, %s33
      %s45 = sphi 0, %s47
      %s48 = sphi 0, %s45
      %s49 = sphi 0, %s48
      %s65 = sphi 0, %s49
      %s73 = sphi 0, %s75
      %s76 = sphi 0, %s73
      %s77 = sphi 0, %s76
      %s93 = sphi 0, %s77
      %s101 = sphi 0, %s103
      %s104 = sphi 0, %s101
      %s105 = sphi 0, %s104
      %s121 = sphi 0, %s105
      %s127 = sphi 0, %s129
      %s130 = sphi 0, %s127
      %s131 = sphi 0, %s130
      %s147 = sphi 0, %s131
      %s151 = sphi 0, %s151
      %s153 = sphi 0, %s151
      %s154 = sphi 0, %s153
      %s168 = sphi 0, %s154
      %s172 = sphi 0, %s172
      %s174 = sphi 0, %s172
      %s175 = sphi 0, %s174
      %s189 = sphi 0, %s175
      %s193 = sphi 0, %s193
      %s195 = sphi 0, %s193
      %s196 = sphi 0, %s195
      %s210 = sphi 0, %s196
      %s216 = sphi 0, %s218
      %s219 = sphi 0, %s216
      %s220 = sphi 0, %s219
      %s236 = sphi 0, %s220
    $region4: #{_run.1} parent=1 // loop_header_branch
      %26 = sbr.rel (%p24) target = $region8
    $region5: #{_run.1} parent=1 // loop_body
      %s28 = ssub.s32 %s23, 1
      %s29 = ssub.s32 %s23, 2
      %s36 = sadd.s32 1, %s31
      %p37 = scmp.ge.s32.totalorder %s36, 4
      %s38 = scalar_select %p37, 0, %s36
      %s39 = sadd.s32 1, %s30
      %s40 = scalar_select %p37, %s39, %s30
      %p41 = scmp.ge.s32.totalorder %s40, 2
      %s42 = scalar_select %p41, 0, %s40
      %s43 = ssub.s32 %s30, %s42
      %p44 = scmp.eq.s32.totalorder %s43, 0
      %s46 = sadd.s32 %s45, 1
      %s47 = scalar_select %p44, %s45, %s46
      %p50 = pneg %p44
      %p51 = scmp.eq.s32.totalorder %s23, 7
      %p52 = por %p50, %p51
      %p53 = scmp.ne.s32.totalorder %s45, %s48
      %p54 = scmp.eq.s32.totalorder %s23, 0
      %p55 = por %p53, %p54
      %p56 = scmp.ne.s32.totalorder %s45, %s48
      %p57 = scmp.eq.s32.totalorder %s28, 7
      %p58 = por %p56, %p57
      %p59 = scmp.ne.s32.totalorder %s48, %s49
      %p60 = scmp.eq.s32.totalorder %s28, 0
      %p61 = por %p59, %p60
      %p62 = scmp.ne.s32.totalorder %s48, %s49
      %p63 = scmp.eq.s32.totalorder %s29, 7
      %p64 = por %p62, %p63
      %p66 = scmp.ne.s32.totalorder %s49, %s65
      %p67 = scmp.eq.s32.totalorder %s29, 0
      %p68 = por %p66, %p67
      %s69 = ssub.s32 %s30, %s42
      %s70 = ssub.s32 %s31, %s38
      %s71 = sor.u32 %s69, %s70
      %p72 = scmp.eq.s32.totalorder %s71, 0
      %s74 = sadd.s32 %s73, 1
      %s75 = scalar_select %p72, %s73, %s74
      %p78 = pneg %p72
      %p79 = scmp.eq.s32.totalorder %s23, 7
      %p80 = por %p78, %p79
      %p81 = scmp.ne.s32.totalorder %s73, %s76
      %p82 = scmp.eq.s32.totalorder %s23, 0
      %p83 = por %p81, %p82
      %p84 = scmp.ne.s32.totalorder %s73, %s76
      %p85 = scmp.eq.s32.totalorder %s28, 7
      %p86 = por %p84, %p85
      %p87 = scmp.ne.s32.totalorder %s76, %s77
      %p88 = scmp.eq.s32.totalorder %s28, 0
      %p89 = por %p87, %p88
      %p90 = scmp.ne.s32.totalorder %s76, %s77
      %p91 = scmp.eq.s32.totalorder %s29, 7
      %p92 = por %p90, %p91
      %p94 = scmp.ne.s32.totalorder %s77, %s93
      %p95 = scmp.eq.s32.totalorder %s29, 0
      %p96 = por %p94, %p95
      %s97 = ssub.s32 %s30, %s42
      %s98 = ssub.s32 %s31, %s38
      %s99 = sor.u32 %s97, %s98
      %p100 = scmp.eq.s32.totalorder %s99, 0
      %s102 = sadd.s32 %s101, 1
      %s103 = scalar_select %p100, %s101, %s102
      %p106 = pneg %p100
      %p107 = scmp.eq.s32.totalorder %s23, 7
      %p108 = por %p106, %p107
      %p109 = scmp.ne.s32.totalorder %s101, %s104
      %p110 = scmp.eq.s32.totalorder %s23, 0
      %p111 = por %p109, %p110
      %p112 = scmp.ne.s32.totalorder %s101, %s104
      %p113 = scmp.eq.s32.totalorder %s28, 7
      %p114 = por %p112, %p113
      %p115 = scmp.ne.s32.totalorder %s104, %s105
      %p116 = scmp.eq.s32.totalorder %s28, 0
      %p117 = por %p115, %p116
      %p118 = scmp.ne.s32.totalorder %s104, %s105
      %p119 = scmp.eq.s32.totalorder %s29, 7
      %p120 = por %p118, %p119
      %p122 = scmp.ne.s32.totalorder %s105, %s121
      %p123 = scmp.eq.s32.totalorder %s29, 0
      %p124 = por %p122, %p123
      %s125 = ssub.s32 %s30, %s42
      %p126 = scmp.eq.s32.totalorder %s125, 0
      %s128 = sadd.s32 %s127, 1
      %s129 = scalar_select %p126, %s127, %s128
      %p132 = pneg %p126
      %p133 = scmp.eq.s32.totalorder %s23, 7
      %p134 = por %p132, %p133
      %p135 = scmp.ne.s32.totalorder %s127, %s130
      %p136 = scmp.eq.s32.totalorder %s23, 0
      %p137 = por %p135, %p136
      %p138 = scmp.ne.s32.totalorder %s127, %s130
      %p139 = scmp.eq.s32.totalorder %s28, 7
      %p140 = por %p138, %p139
      %p141 = scmp.ne.s32.totalorder %s130, %s131
      %p142 = scmp.eq.s32.totalorder %s28, 0
      %p143 = por %p141, %p142
      %p144 = scmp.ne.s32.totalorder %s130, %s131
      %p145 = scmp.eq.s32.totalorder %s29, 7
      %p146 = por %p144, %p145
      %p148 = scmp.ne.s32.totalorder %s131, %s147
      %p149 = scmp.eq.s32.totalorder %s29, 0
      %p150 = por %p148, %p149
      %s152 = sadd.s32 %s151, 1
      %p155 = scmp.eq.s32.totalorder %s23, 7
      %p156 = scmp.ne.s32.totalorder %s151, %s153
      %p157 = scmp.eq.s32.totalorder %s23, 0
      %p158 = por %p156, %p157
      %p159 = scmp.ne.s32.totalorder %s151, %s153
      %p160 = scmp.eq.s32.totalorder %s28, 7
      %p161 = por %p159, %p160
      %p162 = scmp.ne.s32.totalorder %s153, %s154
      %p163 = scmp.eq.s32.totalorder %s28, 0
      %p164 = por %p162, %p163
      %p165 = scmp.ne.s32.totalorder %s153, %s154
      %p166 = scmp.eq.s32.totalorder %s29, 7
      %p167 = por %p165, %p166
      %p169 = scmp.ne.s32.totalorder %s154, %s168
      %p170 = scmp.eq.s32.totalorder %s29, 0
      %p171 = por %p169, %p170
      %s173 = sadd.s32 %s172, 1
      %p176 = scmp.eq.s32.totalorder %s23, 7
      %p177 = scmp.ne.s32.totalorder %s172, %s174
      %p178 = scmp.eq.s32.totalorder %s23, 0
      %p179 = por %p177, %p178
      %p180 = scmp.ne.s32.totalorder %s172, %s174
      %p181 = scmp.eq.s32.totalorder %s28, 7
      %p182 = por %p180, %p181
      %p183 = scmp.ne.s32.totalorder %s174, %s175
      %p184 = scmp.eq.s32.totalorder %s28, 0
      %p185 = por %p183, %p184
      %p186 = scmp.ne.s32.totalorder %s174, %s175
      %p187 = scmp.eq.s32.totalorder %s29, 7
      %p188 = por %p186, %p187
      %p190 = scmp.ne.s32.totalorder %s175, %s189
      %p191 = scmp.eq.s32.totalorder %s29, 0
      %p192 = por %p190, %p191
      %s194 = sadd.s32 %s193, 1
      %p197 = scmp.eq.s32.totalorder %s23, 7
      %p198 = scmp.ne.s32.totalorder %s193, %s195
      %p199 = scmp.eq.s32.totalorder %s23, 0
      %p200 = por %p198, %p199
      %p201 = scmp.ne.s32.totalorder %s193, %s195
      %p202 = scmp.eq.s32.totalorder %s28, 7
      %p203 = por %p201, %p202
      %p204 = scmp.ne.s32.totalorder %s195, %s196
      %p205 = scmp.eq.s32.totalorder %s28, 0
      %p206 = por %p204, %p205
      %p207 = scmp.ne.s32.totalorder %s195, %s196
      %p208 = scmp.eq.s32.totalorder %s29, 7
      %p209 = por %p207, %p208
      %p211 = scmp.ne.s32.totalorder %s196, %s210
      %p212 = scmp.eq.s32.totalorder %s29, 0
      %p213 = por %p211, %p212
      %s214 = ssub.s32 %s30, %s42
      %p215 = scmp.eq.s32.totalorder %s214, 0
      %s217 = sadd.s32 %s216, 1
      %s218 = scalar_select %p215, %s216, %s217
      %p221 = pneg %p215
      %p222 = scmp.eq.s32.totalorder %s23, 7
      %p223 = por %p221, %p222
      %p224 = scmp.ne.s32.totalorder %s216, %s219
      %p225 = scmp.eq.s32.totalorder %s23, 0
      %p226 = por %p224, %p225
      %p227 = scmp.ne.s32.totalorder %s216, %s219
      %p228 = scmp.eq.s32.totalorder %s28, 7
      %p229 = por %p227, %p228
      %p230 = scmp.ne.s32.totalorder %s219, %s220
      %p231 = scmp.eq.s32.totalorder %s28, 0
      %p232 = por %p230, %p231
      %p233 = scmp.ne.s32.totalorder %s219, %s220
      %p234 = scmp.eq.s32.totalorder %s29, 7
      %p235 = por %p233, %p234
      %p237 = scmp.ne.s32.totalorder %s220, %s236
      %p238 = scmp.eq.s32.totalorder %s29, 0
      %p239 = por %p237, %p238
      %p240 = scmp.le.s32.totalorder 1, %s23
      %p241 = scmp.lt.s32.totalorder %s23, 9
      %p242 = pnand %p240, %p241
      %p243 = pneg %p242
      // Predicated region
      $region9: #{_run.1} parent=5 // pred_check
        _
      $region10: #{_run.1} parent=5 // pred_check_branch
        %245 = sbr.rel (%p242) target = $region12
      $region11: #{_run.1} parent=5 // pred_region
        %s246 = ssub.s32 %s23, 1
        // Predicated region
        $region13: #{_run.1} parent=11 // pred_check
          %p247 = pneg %p164
        $region14: #{_run.1} parent=11 // pred_check_branch
          %249 = sbr.rel (%p247) target = $region16
        $region15: #{_run.1} parent=11 // pred_region
          _
        $region16: #{_run.1} parent=11 // pred_fallthru
          _
        // Predicated region
        $region17: #{_run.1} parent=11 // pred_check
          %p250 = pneg %p185
        $region18: #{_run.1} parent=11 // pred_check_branch
          %252 = sbr.rel (%p250) target = $region20
        $region19: #{_run.1} parent=11 // pred_region
          _
        $region20: #{_run.1} parent=11 // pred_fallthru
          _
        // Predicated region
        $region21: #{_run.1} parent=11 // pred_check
          %p253 = pneg %p206
        $region22: #{_run.1} parent=11 // pred_check_branch
          %255 = sbr.rel (%p253) target = $region24
        $region23: #{_run.1} parent=11 // pred_region
          _
        $region24: #{_run.1} parent=11 // pred_fallthru
          _
      $region12: #{_run.1} parent=5 // pred_fallthru
        _
      %p256 = scmp.lt.s32.totalorder %s23, 8
      // Predicated region
      $region25: #{_run.1} parent=5 // pred_check
        %p257 = pneg %p256
      $region26: #{_run.1} parent=5 // pred_check_branch
        %259 = sbr.rel (%p257) target = $region28
      $region27: #{_run.1} parent=5 // pred_region
        // Predicated region
        $region29: #{_run.1} parent=27 // pred_check
          %p260 = pneg %p55
        $region30: #{_run.1} parent=27 // pred_check_branch
          %262 = sbr.rel (%p260) target = $region32
        $region31: #{_run.1} parent=27 // pred_region
          %s263 = sand.u32 %s45, 1
          %s264 = scalar_lea.sflag [#allocation4], %s263
          %s265 = sand.u32 %s45, 1
          %s266 = smul.addr %s265, 64
          %s267 = scalar_lea.vmem [#allocation3], %s266
          %s269 = ssub.s32 1024, 1024
          %270 = vsyncadd %s264, %s269
          %s271 = smul.addr %s30, 8
          %s272 = smul.addr %s271, 128
          %s273 = scalar_lea.hbm %s0, %s272
          %s274 = sshll.u32 %s267, 4
          %s275 = int_to_ptr.vmem [resolvable:$true] %s274
          %280 = dma.hbm_to_vmem [thread:$0]  %s273, 1024, %s275, %s264, 128, 128, 8
        $region32: #{_run.1} parent=27 // pred_fallthru
          _
        // Predicated region
        $region33: #{_run.1} parent=27 // pred_check
          %p281 = pneg %p83
        $region34: #{_run.1} parent=27 // pred_check_branch
          %283 = sbr.rel (%p281) target = $region36
        $region35: #{_run.1} parent=27 // pred_region
          %s284 = sand.u32 %s23, 1
          %s285 = scalar_lea.sflag [#allocation7], %s284
          %s286 = sand.u32 %s73, 1
          %s287 = smul.addr %s286, 32
          %s288 = scalar_lea.vmem [#allocation6], %s287
          %s290 = ssub.s32 512, 512
          %291 = vsyncadd %s285, %s290
          %s292 = smul.addr %s31, 4
          %s293 = smul.addr %s30, 16
          %s294 = sadd.s32 %s292, %s293
          %s295 = smul.addr %s294, 128
          %s296 = scalar_lea.hbm %s1, %s295
          %s297 = sshll.u32 %s288, 4
          %s298 = int_to_ptr.vmem [resolvable:$true] %s297
          %303 = dma.hbm_to_vmem [thread:$0]  %s296, 512, %s298, %s285, 128, 128, 8
        $region36: #{_run.1} parent=27 // pred_fallthru
          _
        // Predicated region
        $region37: #{_run.1} parent=27 // pred_check
          %p304 = pneg %p111
        $region38: #{_run.1} parent=27 // pred_check_branch
          %306 = sbr.rel (%p304) target = $region40
        $region39: #{_run.1} parent=27 // pred_region
          %s307 = sand.u32 %s23, 1
          %s308 = scalar_lea.sflag [#allocation7], %s307
          %s309 = sand.u32 %s101, 1
          %s310 = smul.addr %s309, 32
          %s311 = scalar_lea.vmem [#allocation8], %s310
          %s313 = ssub.s32 512, 512
          %314 = vsyncadd %s308, %s313
          %s315 = smul.addr %s31, 8
          %s316 = smul.addr %s30, 32
          %s317 = sadd.s32 %s315, %s316
          %s318 = smul.addr %s317, 64
          %s319 = scalar_lea.hbm %s2, %s318
          %s320 = sshll.u32 %s311, 4
          %s321 = int_to_ptr.vmem [resolvable:$true] %s320
          %326 = dma.hbm_to_vmem [thread:$0]  %s319, 512, %s321, %s308, 64, 64, 4
        $region40: #{_run.1} parent=27 // pred_fallthru
          _
        // Predicated region
        $region41: #{_run.1} parent=27 // pred_check
          %p327 = pneg %p137
        $region42: #{_run.1} parent=27 // pred_check_branch
          %329 = sbr.rel (%p327) target = $region44
        $region43: #{_run.1} parent=27 // pred_region
          %p330 = scmp.lt.s32.totalorder %s30, 1
          %s331 = scalar_select %p330, %s30, 1
          %s332 = smul.addr %s331, 2
          %s333 = smul.addr %s332, 8
          %s334 = scalar_lea.vmem %s3, %s333
        $region44: #{_run.1} parent=27 // pred_fallthru
          _
      $region28: #{_run.1} parent=5 // pred_fallthru
        _
      %p335 = scmp.le.s32.totalorder 1, %s23
      %p336 = scmp.lt.s32.totalorder %s23, 9
      %p337 = pnand %p335, %p336
      %p338 = pneg %p337
      // Predicated region
      $region45: #{_run.1} parent=5 // pred_check
        _
      $region46: #{_run.1} parent=5 // pred_check_branch
        %340 = sbr.rel (%p337) target = $region48
      $region47: #{_run.1} parent=5 // pred_region
        %s341 = ssub.s32 %s23, 1
        %s342 = sand.u32 %s48, 1
        %s343 = scalar_lea.sflag [#allocation4], %s342
        %s344 = sand.u32 %s48, 1
        %s345 = smul.addr %s344, 64
        %s346 = scalar_lea.vmem [#allocation3], %s345
        // Predicated region
        $region49: #{_run.1} parent=47 // pred_check
          %p347 = pneg %p61
        $region50: #{_run.1} parent=47 // pred_check_branch
          %349 = sbr.rel (%p347) target = $region52
        $region51: #{_run.1} parent=47 // pred_region
          %350 = dma.done %s343, 1024
        $region52: #{_run.1} parent=47 // pred_fallthru
          _
        %s351 = sand.u32 %s28, 1
        %s352 = scalar_lea.sflag [#allocation7], %s351
        %s353 = sand.u32 %s76, 1
        %s354 = smul.addr %s353, 32
        %s355 = scalar_lea.vmem [#allocation6], %s354
        // Predicated region
        $region53: #{_run.1} parent=47 // pred_check
          %p356 = pneg %p89
        $region54: #{_run.1} parent=47 // pred_check_branch
          %358 = sbr.rel (%p356) target = $region56
        $region55: #{_run.1} parent=47 // pred_region
          %359 = dma.done %s352, 512
        $region56: #{_run.1} parent=47 // pred_fallthru
          _
        %s360 = sand.u32 %s28, 1
        %s361 = scalar_lea.sflag [#allocation7], %s360
        %s362 = sand.u32 %s104, 1
        %s363 = smul.addr %s362, 32
        %s364 = scalar_lea.vmem [#allocation8], %s363
        // Predicated region
        $region57: #{_run.1} parent=47 // pred_check
          %p365 = pneg %p117
        $region58: #{_run.1} parent=47 // pred_check_branch
          %367 = sbr.rel (%p365) target = $region60
        $region59: #{_run.1} parent=47 // pred_region
          %368 = dma.done %s361, 512
        $region60: #{_run.1} parent=47 // pred_fallthru
          _
        %s369 = sand.u32 %s48, 1
        %s370 = scalar_lea.sflag [#allocation4], %s369
        %s371 = sand.u32 %s48, 1
        %s372 = smul.addr %s371, 64
        %s373 = scalar_lea.vmem [#allocation3], %s372
        %p374 = pneg %p61
        %p375 = pneg %p58
        %s376 = sand.u32 %s28, 1
        %s377 = scalar_lea.sflag [#allocation7], %s376
        %s378 = sand.u32 %s76, 1
        %s379 = smul.addr %s378, 32
        %s380 = scalar_lea.vmem [#allocation6], %s379
        %p381 = pneg %p89
        %p382 = pneg %p86
        %s383 = sand.u32 %s28, 1
        %s384 = scalar_lea.sflag [#allocation7], %s383
        %s385 = sand.u32 %s104, 1
        %s386 = smul.addr %s385, 32
        %s387 = scalar_lea.vmem [#allocation8], %s386
        %p388 = pneg %p117
        %p389 = pneg %p114
        %p390 = scmp.lt.s32.totalorder %s32, 1
        %s391 = scalar_select %p390, %s32, 1
        %s392 = smul.addr %s391, 2
        %s393 = smul.addr %s392, 8
        %s394 = scalar_lea.vmem %s3, %s393
        %p395 = pneg %p143
        %p396 = pneg %p140
        %p397 = pneg %p164
        %p398 = pneg %p161
        %p399 = pneg %p185
        %p400 = pneg %p182
        %p401 = pneg %p206
        %p402 = pneg %p203
        %p403 = pneg %p232
        %p404 = pneg %p229
        %s405 = sand.u32 %s219, 1
        %s406 = scalar_lea.sflag [#allocation5], %s405
        %s407 = sand.u32 %s219, 1
        %s408 = smul.addr %s407, 64
        %s409 = scalar_lea.vmem [#allocation9], %s408
        %p410 = scmp.lt.s32.totalorder %s32, 1
        %s411 = scalar_select %p410, %s32, 1
        %s412 = smul.addr %s411, 2
        %s413 = smul.addr %s412, 8
        %s414 = scalar_lea.vmem %s3, %s413
        %p416 = scmp.eq.s32.totalorder %s33, 0
        // Predicated region
        $region61: #{_run.1} parent=47 // pred_check
          %p417 = pneg %p416
        $region62: #{_run.1} parent=47 // pred_check_branch
          %419 = sbr.rel (%p417) target = $region64
        $region63: #{_run.1} parent=47 // pred_region
          %vm420 = vcmask 130048
          %421 = vst.msk [vmem:[%s409] sm:$0xff] %vm420, 0.0
          %422 = vst.msk [vmem:[%s409 + $0x8] sm:$0xff] %vm420, 0.0
          %423 = vst.msk [vmem:[%s409 + $0x10] sm:$0xff] %vm420, 0.0
          %424 = vst.msk [vmem:[%s409 + $0x18] sm:$0xff] %vm420, 0.0
          %425 = vst.msk [vmem:[%s409 + $0x20] sm:$0xff] %vm420, 0.0
          %426 = vst.msk [vmem:[%s409 + $0x28] sm:$0xff] %vm420, 0.0
          %427 = vst.msk [vmem:[%s409 + $0x30] sm:$0xff] %vm420, 0.0
          %428 = vst.msk [vmem:[%s409 + $0x38] sm:$0xff] %vm420, 0.0
        $region64: #{_run.1} parent=47 // pred_fallthru
          _
        %v429 = vld [vmem:[%s414] sm:$0xff]
        %v430 = vld [vmem:[%s414 + $0x8] sm:$0xff]
        %v431 = vld [vmem:[%s4] sm:$0xf]
        %v432 = vld [vmem:[%s4 + $0x4] sm:$0xf]
        %v433 = vld [vmem:[%s4 + $0x8] sm:$0xf]
        %v434 = vld [vmem:[%s4 + $0xc] sm:$0xf]
        %v435 = vld [vmem:[%s5] sm:$0xf]
        %v436 = vld [vmem:[%s5 + $0x4] sm:$0xf]
        %v437 = vld [vmem:[%s346] sm:$0xff]
        %v438 = vld [vmem:[%s346 + $0x8] sm:$0xff]
        %v439 = vld [vmem:[%s346 + $0x10] sm:$0xff]
        %v440 = vld [vmem:[%s346 + $0x18] sm:$0xff]
        %s441 = scalar_lea.vmem %s346, 32 [#allocation3]
        %v442 = vld [vmem:[%s441] sm:$0xff]
        %v443 = vld [vmem:[%s441 + $0x8] sm:$0xff]
        %v444 = vld [vmem:[%s441 + $0x10] sm:$0xff]
        %v445 = vld [vmem:[%s441 + $0x18] sm:$0xff]
        %v446 = vld [vmem:[%s364] sm:$0xf]
        %v447 = vld [vmem:[%s364 + $0x4] sm:$0xf]
        %v448 = vld [vmem:[%s364 + $0x8] sm:$0xf]
        %v449 = vld [vmem:[%s364 + $0xc] sm:$0xf]
        %s450 = scalar_lea.vmem %s364, 16 [#allocation8]
        %v451 = vld [vmem:[%s450] sm:$0xf]
        %v452 = vld [vmem:[%s450 + $0x4] sm:$0xf]
        %v453 = vld [vmem:[%s450 + $0x8] sm:$0xf]
        %v454 = vld [vmem:[%s450 + $0xc] sm:$0xf]
        %v455 = vld [vmem:[%s355] sm:$0xff]
        %v456 = vld [vmem:[%s355 + $0x8] sm:$0xff]
        %s457 = scalar_lea.vmem %s355, 16 [#allocation6]
        %v458 = vld [vmem:[%s457] sm:$0xff]
        %v459 = vld [vmem:[%s457 + $0x8] sm:$0xff]
        %v460 = vunpack.c.l.bf16 %v446
        %v461 = vunpack.c.l.bf16 %v447
        %v462 = vunpack.c.l.bf16 %v448
        %v463 = vunpack.c.l.bf16 %v449
        %v464 = vmul.f32 %v437, %v460
        %v465 = vmul.f32 %v438, %v461
        %v466 = vmul.f32 %v439, %v462
        %v467 = vmul.f32 %v440, %v463
        %v468 = vunpack.c.l.bf16 %v451
        %v469 = vunpack.c.l.bf16 %v452
        %v470 = vunpack.c.l.bf16 %v453
        %v471 = vunpack.c.l.bf16 %v454
        %v472 = vmul.f32 %v442, %v468
        %v473 = vmul.f32 %v443, %v469
        %v474 = vmul.f32 %v444, %v470
        %v475 = vmul.f32 %v445, %v471
        %v476 = vsub.f32 %v464, %v472
        %v477 = vsub.f32 %v465, %v473
        %v478 = vsub.f32 %v466, %v474
        %v479 = vsub.f32 %v467, %v475
        %vm480 = vcmask 130048
        %v481 = vsel %vm480, %v476, 0.0
        %v482 = vsel %vm480, %v478, 0.0
        %v483 = vadd.f32 %v481, %v482
        %v484 = vsel %vm480, %v477, 0.0
        %v485 = vsel %vm480, %v479, 0.0
        %v486 = vadd.f32 %v484, %v485
        %v487 = vmul.f32 %v437, %v468
        %v488 = vmul.f32 %v438, %v469
        %v489 = vmul.f32 %v439, %v470
        %v490 = vmul.f32 %v440, %v471
        %v491 = vmul.f32 %v442, %v460
        %v492 = vmul.f32 %v443, %v461
        %v493 = vmul.f32 %v444, %v462
        %v494 = vmul.f32 %v445, %v463
        %v495 = vadd.f32 %v487, %v491
        %v496 = vadd.f32 %v488, %v492
        %v497 = vadd.f32 %v489, %v493
        %v498 = vadd.f32 %v490, %v494
        %v499 = vsel %vm480, %v495, 0.0
        %v500 = vsel %vm480, %v497, 0.0
        %v501 = vadd.f32 %v499, %v500
        %v502 = vsel %vm480, %v496, 0.0
        %v503 = vsel %vm480, %v498, 0.0
        %v504 = vadd.f32 %v502, %v503
        %507 = vrot.lane.b32.xlu0 %v501, 16
        %v508 = vpop.permute.xlu0 %507
        %509 = vrot.lane.b32.xlu0 %v504, 16
        %v510 = vpop.permute.xlu0 %509
        %v513 = vsel %vm480, %v483, %v508
        %v514 = vsel %vm480, %v486, %v510
        %v515 = vpack.c.bf16 %v514, %v513
        %v520 = vunpack.c.l.b16 %v431
        %v521 = vunpack.c.l.b16 %v432
        %v522 = vunpack.c.l.b16 %v433
        %v523 = vunpack.c.l.b16 %v434
        %v524 = vpack.c.b16 %v521, %v520
        %v525 = vpack.c.b16 %v523, %v522
        %v527 = vsel %vm480, %v524, 0
        %v530 = vsel %vm480, %v525, 0
        %532 = vmatprep.subr.bf16.mxu0 0
        %533 = vmatpush1.bf16.msra.mxu0 %v515
        %534 = vmatprep.subr.bf16.mxu0 0
        %535 = vmatpush1.bf16.msra.mxu0 0
        %536 = vmatprep.subr.bf16.mxu0 0
        %537 = vmatpush1.bf16.msra.mxu0 0
        %538 = vmatprep.subr.bf16.mxu0 0
        %539 = vmatpush1.bf16.msra.mxu0 0
        %540 = vmatprep.subr.bf16.mxu0 0
        %541 = vmatpush1.bf16.msra.mxu0 0
        %542 = vmatprep.subr.bf16.mxu0 0
        %543 = vmatpush1.bf16.msra.mxu0 0
        %544 = vmatprep.subr.bf16.mxu0 0
        %545 = vmatpush1.bf16.msra.mxu0 0
        %546 = vmatprep.subr.bf16.mxu0 0
        %547 = vmatpush1.bf16.msra.mxu0 0
        %548 = vmatprep.subr.bf16.mxu0 0
        %549 = vmatpush1.bf16.msra.mxu0 0
        %550 = vmatprep.subr.bf16.mxu0 0
        %551 = vmatpush1.bf16.msra.mxu0 0
        %552 = vmatprep.subr.bf16.mxu0 0
        %553 = vmatpush1.bf16.msra.mxu0 0
        %554 = vmatprep.subr.bf16.mxu0 0
        %555 = vmatpush1.bf16.msra.mxu0 0
        %556 = vmatprep.subr.bf16.mxu0 0
        %557 = vmatpush1.bf16.msra.mxu0 0
        %558 = vmatprep.subr.bf16.mxu0 0
        %559 = vmatpush1.bf16.msra.mxu0 0
        %560 = vmatprep.subr.bf16.mxu0 0
        %561 = vmatpush1.bf16.msra.mxu0 0
        %562 = vmatprep.subr.bf16.mxu0 0
        %563 = vmatpush1.bf16.msra.mxu0 0
        %564 = vmatprep.mubr.bf16.mxu0 0
        %565 = vmatmul.mubr.bf16.gmra.mrb[0].mxu0 %v527
        %v566 = vpop.f32.mrb[0].mxu0
        %v567 = vadd.f32 0.0, %v566
        %v568 = vpop.f32.mrb[0].mxu0
        %v569 = vpop.f32.mrb[0].mxu0
        %v570 = vadd.f32 0.0, %v569
        %v571 = vpop.f32.mrb[0].mxu0
        %572 = vmatprep.mubr.bf16.mxu0 0
        %573 = vmatmul.mubr.bf16.gmra.mrb[0].mxu0 %v530
        %v574 = vpop.f32.mrb[0].mxu0
        %v575 = vadd.f32 0.0, %v574
        %v576 = vpop.f32.mrb[0].mxu0
        %v577 = vpop.f32.mrb[0].mxu0
        %v578 = vadd.f32 0.0, %v577
        %v579 = vpop.f32.mrb[0].mxu0
        %580 = vdwg.mxu0
        %583 = vrot.lane.b32.xlu0 %v575, 112
        %v584 = vpop.permute.xlu0 %583
        %585 = vrot.lane.b32.xlu0 %v578, 112
        %v586 = vpop.permute.xlu0 %585
        %v589 = vsub.f32 %v567, %v584
        %v590 = vsub.f32 %v570, %v586
        %591 = vrot.lane.b32.xlu0 %v575, 16
        %v592 = vpop.permute.xlu0 %591
        %593 = vrot.lane.b32.xlu0 %v578, 16
        %v594 = vpop.permute.xlu0 %593
        %v597 = vadd.f32 %v567, %v592
        %v598 = vadd.f32 %v570, %v594
        %601 = vrot.lane.b32.xlu0 %v597, 112
        %v602 = vpop.permute.xlu0 %601
        %603 = vrot.lane.b32.xlu0 %v598, 112
        %v604 = vpop.permute.xlu0 %603
        %v607 = vpack.c.bf16 %v590, %v589
        %v608 = vpack.c.bf16 %v604, %v602
        %v611 = vunpack.c.l.b16 %v435
        %v612 = vunpack.c.l.b16 %v436
        %v613 = vpack.c.b16 %v612, %v611
        %v616 = vsel %vm480, %v607, 0
        %v619 = vsel %vm480, %v608, 0
        %621 = vmatprep.subr.bf16.mxu0 0
        %622 = vmatpush1.bf16.msra.mxu0 %v613
        %623 = vmatprep.subr.bf16.mxu0 0
        %624 = vmatpush1.bf16.msra.mxu0 0
        %625 = vmatprep.subr.bf16.mxu0 0
        %626 = vmatpush1.bf16.msra.mxu0 0
        %627 = vmatprep.subr.bf16.mxu0 0
        %628 = vmatpush1.bf16.msra.mxu0 0
        %629 = vmatprep.subr.bf16.mxu0 0
        %630 = vmatpush1.bf16.msra.mxu0 0
        %631 = vmatprep.subr.bf16.mxu0 0
        %632 = vmatpush1.bf16.msra.mxu0 0
        %633 = vmatprep.subr.bf16.mxu0 0
        %634 = vmatpush1.bf16.msra.mxu0 0
        %635 = vmatprep.subr.bf16.mxu0 0
        %636 = vmatpush1.bf16.msra.mxu0 0
        %637 = vmatprep.subr.bf16.mxu0 0
        %638 = vmatpush1.bf16.msra.mxu0 0
        %639 = vmatprep.subr.bf16.mxu0 0
        %640 = vmatpush1.bf16.msra.mxu0 0
        %641 = vmatprep.subr.bf16.mxu0 0
        %642 = vmatpush1.bf16.msra.mxu0 0
        %643 = vmatprep.subr.bf16.mxu0 0
        %644 = vmatpush1.bf16.msra.mxu0 0
        %645 = vmatprep.subr.bf16.mxu0 0
        %646 = vmatpush1.bf16.msra.mxu0 0
        %647 = vmatprep.subr.bf16.mxu0 0
        %648 = vmatpush1.bf16.msra.mxu0 0
        %649 = vmatprep.subr.bf16.mxu0 0
        %650 = vmatpush1.bf16.msra.mxu0 0
        %651 = vmatprep.subr.bf16.mxu0 0
        %652 = vmatpush1.bf16.msra.mxu0 0
        %653 = vmatprep.mubr.bf16.mxu0 0
        %654 = vmatmul.mubr.bf16.gmra.mrb[0].mxu0 %v616
        %v655 = vpop.f32.mrb[0].mxu0
        %v656 = vadd.f32 0.0, %v655
        %v657 = vpop.f32.mrb[0].mxu0
        %v658 = vpop.f32.mrb[0].mxu0
        %v659 = vadd.f32 0.0, %v658
        %v660 = vpop.f32.mrb[0].mxu0
        %661 = vmatprep.mubr.bf16.mxu0 0
        %662 = vmatmul.mubr.bf16.gmra.mrb[0].mxu0 %v619
        %v663 = vpop.f32.mrb[0].mxu0
        %v664 = vadd.f32 0.0, %v663
        %v665 = vpop.f32.mrb[0].mxu0
        %v666 = vpop.f32.mrb[0].mxu0
        %v667 = vadd.f32 0.0, %v666
        %v668 = vpop.f32.mrb[0].mxu0
        %669 = vdwg.mxu0
        %672 = vrot.lane.b32.xlu0 %v664, 112
        %v673 = vpop.permute.xlu0 %672
        %674 = vrot.lane.b32.xlu0 %v667, 112
        %v675 = vpop.permute.xlu0 %674
        %v678 = vsub.f32 %v656, %v673
        %v679 = vsub.f32 %v659, %v675
        %680 = vrot.lane.b32.xlu0 %v664, 16
        %v681 = vpop.permute.xlu0 %680
        %682 = vrot.lane.b32.xlu0 %v667, 16
        %v683 = vpop.permute.xlu0 %682
        %v686 = vadd.f32 %v656, %v681
        %v687 = vadd.f32 %v659, %v683
        %v688 = vmul.f32 %v678, %v429
        %v689 = vmul.f32 %v679, %v430
        %v690 = vsub.f32 %v688, %v455
        %v691 = vsub.f32 %v689, %v456
        %694 = vrot.lane.b32.xlu0 %v429, 16
        %v695 = vpop.permute.xlu0 %694
        %696 = vrot.lane.b32.xlu0 %v430, 16
        %v697 = vpop.permute.xlu0 %696
        %v700 = vmul.f32 %v686, %v695
        %v701 = vmul.f32 %v687, %v697
        %704 = vrot.lane.b32.xlu0 %v458, 16
        %v705 = vpop.permute.xlu0 %704
        %706 = vrot.lane.b32.xlu0 %v459, 16
        %v707 = vpop.permute.xlu0 %706
        %v710 = vsub.f32 %v700, %v705
        %v711 = vsub.f32 %v701, %v707
        %v712 = vmul.f32 %v690, %v429
        %v713 = vmul.f32 %v691, %v430
        %v714 = vmul.f32 %v710, %v695
        %v715 = vmul.f32 %v711, %v697
        %v716 = vsel %vm480, %v712, %v714
        %v717 = vsel %vm480, %v713, %v715
        %v718 = vpack.c.bf16 %v717, %v716
        %719 = vmatprep.subr.bf16.mxu0 0
        %720 = vmatpush1.bf16.msra.mxu0 %v718
        %721 = vmatprep.subr.bf16.mxu0 0
        %722 = vmatpush1.bf16.msra.mxu0 0
        %723 = vmatprep.subr.bf16.mxu0 0
        %724 = vmatpush1.bf16.msra.mxu0 0
        %725 = vmatprep.subr.bf16.mxu0 0
        %726 = vmatpush1.bf16.msra.mxu0 0
        %727 = vmatprep.subr.bf16.mxu0 0
        %728 = vmatpush1.bf16.msra.mxu0 0
        %729 = vmatprep.subr.bf16.mxu0 0
        %730 = vmatpush1.bf16.msra.mxu0 0
        %731 = vmatprep.subr.bf16.mxu0 0
        %732 = vmatpush1.bf16.msra.mxu0 0
        %733 = vmatprep.subr.bf16.mxu0 0
        %734 = vmatpush1.bf16.msra.mxu0 0
        %735 = vmatprep.subr.bf16.mxu0 0
        %736 = vmatpush1.bf16.msra.mxu0 0
        %737 = vmatprep.subr.bf16.mxu0 0
        %738 = vmatpush1.bf16.msra.mxu0 0
        %739 = vmatprep.subr.bf16.mxu0 0
        %740 = vmatpush1.bf16.msra.mxu0 0
        %741 = vmatprep.subr.bf16.mxu0 0
        %742 = vmatpush1.bf16.msra.mxu0 0
        %743 = vmatprep.subr.bf16.mxu0 0
        %744 = vmatpush1.bf16.msra.mxu0 0
        %745 = vmatprep.subr.bf16.mxu0 0
        %746 = vmatpush1.bf16.msra.mxu0 0
        %747 = vmatprep.subr.bf16.mxu0 0
        %748 = vmatpush1.bf16.msra.mxu0 0
        %749 = vmatprep.subr.bf16.mxu0 0
        %750 = vmatpush1.bf16.msra.mxu0 0
        %751 = vmatprep.mubr.bf16.mxu0 0
        %752 = vmatmul.mubr.bf16.gmra.mrb[0].mxu0 %v527
        %v753 = vpop.f32.mrb[0].mxu0
        %v754 = vadd.f32 0.0, %v753
        %v755 = vpop.f32.mrb[0].mxu0
        %v756 = vpop.f32.mrb[0].mxu0
        %v757 = vadd.f32 0.0, %v756
        %v758 = vpop.f32.mrb[0].mxu0
        %759 = vmatprep.mubr.bf16.mxu0 0
        %760 = vmatmul.mubr.bf16.gmra.mrb[0].mxu0 %v530
        %v761 = vpop.f32.mrb[0].mxu0
        %v762 = vadd.f32 0.0, %v761
        %v763 = vpop.f32.mrb[0].mxu0
        %v764 = vpop.f32.mrb[0].mxu0
        %v765 = vadd.f32 0.0, %v764
        %v766 = vpop.f32.mrb[0].mxu0
        %767 = vdwg.mxu0
        %770 = vrot.lane.b32.xlu0 %v762, 112
        %v771 = vpop.permute.xlu0 %770
        %772 = vrot.lane.b32.xlu0 %v765, 112
        %v773 = vpop.permute.xlu0 %772
        %v776 = vadd.f32 %v754, %v771
        %v777 = vadd.f32 %v757, %v773
        %778 = vrot.lane.b32.xlu0 %v762, 16
        %v779 = vpop.permute.xlu0 %778
        %780 = vrot.lane.b32.xlu0 %v765, 16
        %v781 = vpop.permute.xlu0 %780
        %v784 = vsub.f32 %v754, %v779
        %v785 = vsub.f32 %v757, %v781
        %788 = vrot.lane.b32.xlu0 %v784, 112
        %v789 = vpop.permute.xlu0 %788
        %790 = vrot.lane.b32.xlu0 %v785, 112
        %v791 = vpop.permute.xlu0 %790
        %v794 = vpack.c.bf16 %v777, %v776
        %v795 = vpack.c.bf16 %v791, %v789
        %v797 = vsel %vm480, %v794, 0
        %v800 = vsel %vm480, %v795, 0
        %802 = vmatprep.subr.bf16.mxu0 0
        %803 = vmatpush1.bf16.msra.mxu0 %v613
        %804 = vmatprep.subr.bf16.mxu0 0
        %805 = vmatpush1.bf16.msra.mxu0 0
        %806 = vmatprep.subr.bf16.mxu0 0
        %807 = vmatpush1.bf16.msra.mxu0 0
        %808 = vmatprep.subr.bf16.mxu0 0
        %809 = vmatpush1.bf16.msra.mxu0 0
        %810 = vmatprep.subr.bf16.mxu0 0
        %811 = vmatpush1.bf16.msra.mxu0 0
        %812 = vmatprep.subr.bf16.mxu0 0
        %813 = vmatpush1.bf16.msra.mxu0 0
        %814 = vmatprep.subr.bf16.mxu0 0
        %815 = vmatpush1.bf16.msra.mxu0 0
        %816 = vmatprep.subr.bf16.mxu0 0
        %817 = vmatpush1.bf16.msra.mxu0 0
        %818 = vmatprep.subr.bf16.mxu0 0
        %819 = vmatpush1.bf16.msra.mxu0 0
        %820 = vmatprep.subr.bf16.mxu0 0
        %821 = vmatpush1.bf16.msra.mxu0 0
        %822 = vmatprep.subr.bf16.mxu0 0
        %823 = vmatpush1.bf16.msra.mxu0 0
        %824 = vmatprep.subr.bf16.mxu0 0
        %825 = vmatpush1.bf16.msra.mxu0 0
        %826 = vmatprep.subr.bf16.mxu0 0
        %827 = vmatpush1.bf16.msra.mxu0 0
        %828 = vmatprep.subr.bf16.mxu0 0
        %829 = vmatpush1.bf16.msra.mxu0 0
        %830 = vmatprep.subr.bf16.mxu0 0
        %831 = vmatpush1.bf16.msra.mxu0 0
        %832 = vmatprep.subr.bf16.mxu0 0
        %833 = vmatpush1.bf16.msra.mxu0 0
        %834 = vmatprep.mubr.bf16.mxu0 0
        %835 = vmatmul.mubr.bf16.gmra.mrb[0].mxu0 %v797
        %v836 = vpop.f32.mrb[0].mxu0
        %v837 = vadd.f32 0.0, %v836
        %v838 = vpop.f32.mrb[0].mxu0
        %v839 = vpop.f32.mrb[0].mxu0
        %v840 = vadd.f32 0.0, %v839
        %v841 = vpop.f32.mrb[0].mxu0
        %842 = vmatprep.mubr.bf16.mxu0 0
        %843 = vmatmul.mubr.bf16.gmra.mrb[0].mxu0 %v800
        %v844 = vpop.f32.mrb[0].mxu0
        %v845 = vadd.f32 0.0, %v844
        %v846 = vpop.f32.mrb[0].mxu0
        %v847 = vpop.f32.mrb[0].mxu0
        %v848 = vadd.f32 0.0, %v847
        %v849 = vpop.f32.mrb[0].mxu0
        %850 = vdwg.mxu0
        %853 = vrot.lane.b32.xlu0 %v845, 112
        %v854 = vpop.permute.xlu0 %853
        %855 = vrot.lane.b32.xlu0 %v848, 112
        %v856 = vpop.permute.xlu0 %855
        %v859 = vadd.f32 %v837, %v854
        %v860 = vadd.f32 %v840, %v856
        %863 = vrot.lane.b32.xlu0 %v837, 112
        %v864 = vpop.permute.xlu0 %863
        %865 = vrot.lane.b32.xlu0 %v840, 112
        %v866 = vpop.permute.xlu0 %865
        %v869 = vsub.f32 %v845, %v864
        %v870 = vsub.f32 %v848, %v866
        %v871 = vld [vmem:[%s409] sm:$0xff]
        %v872 = vld [vmem:[%s409 + $0x8] sm:$0xff]
        %v873 = vld [vmem:[%s409 + $0x10] sm:$0xff]
        %v874 = vld [vmem:[%s409 + $0x18] sm:$0xff]
        %v875 = vmul.f32 %v859, %v460
        %v876 = vmul.f32 %v860, %v461
        %v877 = vmul.f32 %v859, %v462
        %v878 = vmul.f32 %v860, %v463
        %v879 = vmul.f32 %v869, %v468
        %v880 = vmul.f32 %v870, %v469
        %v881 = vmul.f32 %v869, %v470
        %v882 = vmul.f32 %v870, %v471
        %v883 = vadd.f32 %v875, %v879
        %v884 = vadd.f32 %v876, %v880
        %v885 = vadd.f32 %v877, %v881
        %v886 = vadd.f32 %v878, %v882
        %v887 = vadd.f32 %v871, %v883
        %v888 = vadd.f32 %v872, %v884
        %v889 = vadd.f32 %v873, %v885
        %v890 = vadd.f32 %v874, %v886
        %891 = vst.msk [vmem:[%s409] sm:$0xff] %vm480, %v887
        %892 = vst.msk [vmem:[%s409 + $0x8] sm:$0xff] %vm480, %v888
        %893 = vst.msk [vmem:[%s409 + $0x10] sm:$0xff] %vm480, %v889
        %894 = vst.msk [vmem:[%s409 + $0x18] sm:$0xff] %vm480, %v890
        %s895 = scalar_lea.vmem %s409, 32 [#allocation9]
        %v896 = vld [vmem:[%s895] sm:$0xff]
        %v897 = vld [vmem:[%s895 + $0x8] sm:$0xff]
        %v898 = vld [vmem:[%s895 + $0x10] sm:$0xff]
        %v899 = vld [vmem:[%s895 + $0x18] sm:$0xff]
        %v900 = vmul.f32 %v869, %v460
        %v901 = vmul.f32 %v870, %v461
        %v902 = vmul.f32 %v869, %v462
        %v903 = vmul.f32 %v870, %v463
        %v904 = vmul.f32 %v859, %v468
        %v905 = vmul.f32 %v860, %v469
        %v906 = vmul.f32 %v859, %v470
        %v907 = vmul.f32 %v860, %v471
        %v908 = vsub.f32 %v900, %v904
        %v909 = vsub.f32 %v901, %v905
        %v910 = vsub.f32 %v902, %v906
        %v911 = vsub.f32 %v903, %v907
        %v912 = vadd.f32 %v896, %v908
        %v913 = vadd.f32 %v897, %v909
        %v914 = vadd.f32 %v898, %v910
        %v915 = vadd.f32 %v899, %v911
        %916 = vst.msk [vmem:[%s895] sm:$0xff] %vm480, %v912
        %917 = vst.msk [vmem:[%s895 + $0x8] sm:$0xff] %vm480, %v913
        %918 = vst.msk [vmem:[%s895 + $0x10] sm:$0xff] %vm480, %v914
        %919 = vst.msk [vmem:[%s895 + $0x18] sm:$0xff] %vm480, %v915
        %p920 = scmp.eq.s32.totalorder %s33, 3
        // Predicated region
        $region65: #{_run.1} parent=47 // pred_check
          %p921 = pneg %p920
        $region66: #{_run.1} parent=47 // pred_check_branch
          %923 = sbr.rel (%p921) target = $region68
        $region67: #{_run.1} parent=47 // pred_region
          %s924 = sld [smem:[#allocation2]]
          %v925 = vld [vmem:[%s409] sm:$0xff]
          %v926 = vld [vmem:[%s409 + $0x8] sm:$0xff]
          %v927 = vld [vmem:[%s409 + $0x10] sm:$0xff]
          %v928 = vld [vmem:[%s409 + $0x18] sm:$0xff]
          %v929 = vstv %s924
          %v930 = vmul.f32 %v929, %v925
          %v931 = vmul.f32 %v929, %v926
          %v932 = vmul.f32 %v929, %v927
          %v933 = vmul.f32 %v929, %v928
          %v934 = vsub.f32 %v437, %v930
          %v935 = vsub.f32 %v438, %v931
          %v936 = vsub.f32 %v439, %v932
          %v937 = vsub.f32 %v440, %v933
          %938 = vst.msk [vmem:[%s409] sm:$0xff] %vm480, %v934
          %939 = vst.msk [vmem:[%s409 + $0x8] sm:$0xff] %vm480, %v935
          %940 = vst.msk [vmem:[%s409 + $0x10] sm:$0xff] %vm480, %v936
          %941 = vst.msk [vmem:[%s409 + $0x18] sm:$0xff] %vm480, %v937
          %v942 = vld [vmem:[%s895] sm:$0xff]
          %v943 = vld [vmem:[%s895 + $0x8] sm:$0xff]
          %v944 = vld [vmem:[%s895 + $0x10] sm:$0xff]
          %v945 = vld [vmem:[%s895 + $0x18] sm:$0xff]
          %v946 = vmul.f32 %v929, %v942
          %v947 = vmul.f32 %v929, %v943
          %v948 = vmul.f32 %v929, %v944
          %v949 = vmul.f32 %v929, %v945
          %v950 = vsub.f32 %v442, %v946
          %v951 = vsub.f32 %v443, %v947
          %v952 = vsub.f32 %v444, %v948
          %v953 = vsub.f32 %v445, %v949
          %954 = vst.msk [vmem:[%s895] sm:$0xff] %vm480, %v950
          %955 = vst.msk [vmem:[%s895 + $0x8] sm:$0xff] %vm480, %v951
          %956 = vst.msk [vmem:[%s895 + $0x10] sm:$0xff] %vm480, %v952
          %957 = vst.msk [vmem:[%s895 + $0x18] sm:$0xff] %vm480, %v953
        $region68: #{_run.1} parent=47 // pred_fallthru
          _
        %s958 = sand.u32 %s219, 1
        %s959 = scalar_lea.sflag [#allocation5], %s958
        %s960 = sand.u32 %s219, 1
        %s961 = smul.addr %s960, 64
        %s962 = scalar_lea.vmem [#allocation9], %s961
        // Predicated region
        $region69: #{_run.1} parent=47 // pred_check
          %p963 = pneg %p229
        $region70: #{_run.1} parent=47 // pred_check_branch
          %965 = sbr.rel (%p963) target = $region72
        $region71: #{_run.1} parent=47 // pred_region
          %s967 = ssub.s32 1024, 1024
          %968 = vsyncadd %s959, %s967
          %s969 = smul.addr %s32, 8
          %s970 = smul.addr %s969, 128
          %s971 = scalar_lea.hbm %s7, %s970
          %s972 = sshll.u32 %s962, 4
          %s973 = int_to_ptr.vmem [resolvable:$true] %s972
          %978 = dma.vmem_to_hbm [thread:$0]  %s973, 1024, %s971, %s959, 128, 128, 8
        $region72: #{_run.1} parent=47 // pred_fallthru
          _
      $region48: #{_run.1} parent=5 // pred_fallthru
        _
      %p979 = scmp.le.s32.totalorder 2, %s23
      // Predicated region
      $region73: #{_run.1} parent=5 // pred_check
        %p980 = pneg %p979
      $region74: #{_run.1} parent=5 // pred_check_branch
        %982 = sbr.rel (%p980) target = $region76
      $region75: #{_run.1} parent=5 // pred_region
        %s983 = ssub.s32 %s23, 2
        // Predicated region
        $region77: #{_run.1} parent=75 // pred_check
          %p984 = pneg %p235
        $region78: #{_run.1} parent=75 // pred_check_branch
          %986 = sbr.rel (%p984) target = $region80
        $region79: #{_run.1} parent=75 // pred_region
          %s987 = sand.u32 %s220, 1
          %s988 = scalar_lea.sflag [#allocation5], %s987
          %s989 = sand.u32 %s220, 1
          %s990 = smul.addr %s989, 64
          %s991 = scalar_lea.vmem [#allocation9], %s990
          %992 = dma.done %s988, 1024
        $region80: #{_run.1} parent=75 // pred_fallthru
          _
      $region76: #{_run.1} parent=5 // pred_fallthru
        _
    $region6: #{_run.1} parent=1 // loop_footer
      %s27 = sadd.s32 1, %s23
    $region7: #{_run.1} parent=1 // loop_footer_branch
      %22 = sbr.rel target = $region3
    $region8: #{_run.1} parent=1 // loop_exit
      _
    %993 = vsyncpa [#allocation4], 1
    %s994 = scalar_lea.sflag [#allocation4], 1
    %995 = vsyncpa %s994, 1
    %996 = vsyncpa [#allocation7], 1
    %s997 = scalar_lea.sflag [#allocation7], 1
    %998 = vsyncpa %s997, 1
    %999 = vsyncpa [#allocation5], 1
    %s1000 = scalar_lea.sflag [#allocation5], 1
    %1001 = vsyncpa %s1000, 1

</llo_original>
